<compile_context>
chip_gen: v7x
topology: tpu7x:2x2x1
jax: 0.10.0
libtpu: 0.0.40
codegen_flags: <defaults>
</compile_context>

<pallas_src>
import functools

import jax
import jax.numpy as jnp
from jax.experimental import pallas as pl
from jax.experimental.pallas import tpu as pltpu


def _att_mask_kernel(x_ref, g_ref, bt_ref, w1_ref, b1_ref, w2_ref, b2_ref,
                     w3_ref, b3_ref, o_ref, *, seq_len, local_window):
    # x_ref: (tS, D) rows of one batch element.  o_ref: (tS, S).
    x = x_ref[...].astype(jnp.float32)                      # (tS, D)

    # ---- DNN.biasModel with withLN=True ----
    mean = jnp.mean(x, axis=-1, keepdims=True)
    var = jnp.mean((x - mean) ** 2, axis=-1, keepdims=True)
    xn = (x - mean) * jax.lax.rsqrt(var + 1e-5)
    xn = xn * g_ref[...] + bt_ref[...]                      # (tS, D)

    h1 = jnp.dot(xn, w1_ref[...], preferred_element_type=jnp.float32) + b1_ref[...]
    h1 = jnp.maximum(h1, 0.0)                               # (tS, 128)
    h2 = jnp.dot(h1, w2_ref[...], preferred_element_type=jnp.float32) + b2_ref[...]
    h2 = jnp.maximum(h2, 0.0)                               # (tS, 128)
    # fc3 (128 -> 1) as a lane (XLU) reduction against the transposed weight row.
    h3 = jnp.sum(h2 * w3_ref[...], axis=-1, keepdims=True) + b3_ref[...]
    h3 = jnp.maximum(h3, 0.0)                               # (tS, 1)

    # ---- bias + local mask (lm/|lm| == 1 since lm >= 1) ----
    # bias is integer-valued after round(); int32 keeps the band compare exact
    # for any S (bf16 iota would corrupt boundaries for S > 256).
    bias_i = jnp.round(jax.nn.sigmoid(h3) * jnp.float32(seq_len)).astype(jnp.int32)
    lo = bias_i - jnp.int32(local_window)                   # (tS, 1)
    rows = o_ref.shape[0]
    col = jax.lax.broadcasted_iota(jnp.int32, (rows, seq_len), 1)   # (tS, S)
    band = col - lo                                         # (tS, S)
    # keep iff 0 <= band <= 2W  <=>  (unsigned) band <= 2W  (single compare)
    too_far = pltpu.bitcast(band, jnp.uint32) > jnp.uint32(2 * local_window)
    # Select in f32 (v5e VPU has no bf16); single pack on the final astype.
    o_ref[...] = jnp.where(too_far, jnp.float32(-jnp.inf),
                           jnp.float32(1.0)).astype(o_ref.dtype)


def _vmem_capacity_bytes():
    try:
        return int(pltpu.get_tpu_info().vmem_capacity_bytes)
    except Exception:
        return 64 << 20          # conservative fallback (v7x per-TC VMEM)


def _pick_row_tile(B, S, D, out_itemsize):
    """Largest row tile (multiple of 8, dividing S) whose double-buffered
    input + output blocks fit a generation-aware VMEM budget."""
    cap = _vmem_capacity_bytes()
    # 128 MiB-VMEM chips (v5e/v6e) -> 56 MiB tile budget; 64 MiB (v7x) -> 40 MiB.
    budget = (56 << 20) if cap >= (100 << 20) else (40 << 20)
    if S % 8 != 0:
        # TODO(synk): ragged S falls back to a single full-S block; pad/clamp S
        # for very large ragged sequences instead of risking a VMEM overflow.
        return S
    best = 8
    cand = 8
    while cand <= S:
        if S % cand == 0 and 2 * cand * (S * out_itemsize + D * 4) <= budget:
            best = cand
        cand *= 2
    # v7x megacore: keep at least 2 grid steps so both TensorCores get work.
    # The extra grid step (~0.35us) is negligible on single-TC chips.
    if B * (S // best) < 2 and best % 16 == 0:
        best //= 2
    return best


def comput_att_mask(fusion_arr, params, *, local_window_size=3,
                    row_tile=None, out_dtype=jnp.bfloat16):
    """fusion_arr: [B, S, D] float32 -> local attention mask [B, S, S]."""
    B, S, D = fusion_arr.shape
    g, bt, w1, b1, w2, b2, w3t, b3 = params
    out_itemsize = jnp.dtype(out_dtype).itemsize

    tS = row_tile if row_tile is not None else _pick_row_tile(B, S, D, out_itemsize)
    if S % tS != 0:
        tS = S                        # keep blocks equal to full dims if ragged

    # Explicit scoped-VMEM limit sized to the actual footprint (double-buffered
    # tiles + double-buffered constant param blocks + internal-scratch margin),
    # clamped to physical VMEM.  Avoids both silent tile downsizing and OOM.
    cap = _vmem_capacity_bytes()
    tile_bytes = 2 * tS * (S * out_itemsize + D * 4)
    param_bytes = 2 * 4 * (2 * D + D * 128 + 128 + 128 * 128 + 128 + 128 + 1)
    vmem_limit = int(min(cap, max(32 << 20, tile_bytes + param_bytes + (8 << 20))))

    kernel = functools.partial(_att_mask_kernel, seq_len=S,
                               local_window=local_window_size)

    cost = pl.CostEstimate(
        flops=2 * B * S * (D * 128 + 128 * 128 + 128) + 2 * B * S * S,
        transcendentals=B * S,
        bytes_accessed=B * S * D * 4 + B * S * S * out_itemsize + param_bytes // 2,
    )

    const = lambda shape: pl.BlockSpec(shape, lambda b, s: (0,) * len(shape))
    return pl.pallas_call(
        kernel,
        out_shape=jax.ShapeDtypeStruct((B, S, S), out_dtype),
        grid_spec=pltpu.PrefetchScalarGridSpec(
            num_scalar_prefetch=0,
            grid=(B, S // tS),
            in_specs=[
                # Leading batch dim squeezed (None) -> kernel sees (tS, D).
                pl.BlockSpec((None, tS, D), lambda b, s: (b, s, 0)),  # fusionArr
                const((1, D)),        # LN gamma
                const((1, D)),        # LN beta
                const((D, 128)),      # fc1 weight (in, out)
                const((1, 128)),      # fc1 bias
                const((128, 128)),    # fc2 weight
                const((1, 128)),      # fc2 bias
                const((1, 128)),      # fc3 weight (transposed row)
                const((1, 1)),        # fc3 bias
            ],
            # Lane-dense (tS, S) output slab per step; batch dim squeezed.
            out_specs=pl.BlockSpec((None, tS, S), lambda b, s: (b, s, 0)),
        ),
        compiler_params=pltpu.CompilerParams(
            dimension_semantics=("parallel", "parallel"),
            vmem_limit_bytes=vmem_limit),
        cost_estimate=cost,
    )(fusion_arr, g, bt, w1, b1, w2, b2, w3t, b3)


def make_params(key, dim_in):
    """Deterministic synthetic init matching the DNN parameter shapes."""
    k1, k2, k3, k4, k5, k6 = jax.random.split(key, 6)
    w1 = jax.random.normal(k1, (dim_in, 128), jnp.float32) * jnp.sqrt(2.0 / 128.0)
    b1 = jax.random.uniform(k2, (1, 128), jnp.float32, -0.1, 0.1)
    w2 = jax.random.normal(k3, (128, 128), jnp.float32) * jnp.sqrt(2.0 / 128.0)
    b2 = jax.random.uniform(k4, (1, 128), jnp.float32, -0.1, 0.1)
    w3t = jax.random.normal(k5, (1, 128), jnp.float32) * 0.05
    b3 = jax.random.uniform(k6, (1, 1), jnp.float32, -0.1, 0.1)
    gamma = jnp.ones((1, dim_in), jnp.float32)
    beta = jnp.zeros((1, dim_in), jnp.float32)
    return (gamma, beta, w1, b1, w2, b2, w3t, b3)


def _reference(fusion_arr, params, local_window_size=3):
    # Faithful (un-simplified) replica of the PyTorch forward, in JAX (f32).
    g, bt, w1, b1, w2, b2, w3t, b3 = params
    B, S, D = fusion_arr.shape
    x = fusion_arr
    mean = jnp.mean(x, axis=-1, keepdims=True)
    var = jnp.mean((x - mean) ** 2, axis=-1, keepdims=True)
    xn = (x - mean) / jnp.sqrt(var + 1e-5) * g[0] + bt[0]
    h1 = jnp.maximum(xn @ w1 + b1[0], 0.0)
    h2 = jnp.maximum(h1 @ w2 + b2[0], 0.0)
    h3 = jnp.maximum(h2 @ w3t.T + b3[0, 0], 0.0)[..., 0]          # (B, S)
    bias = jnp.round(jax.nn.sigmoid(h3) * S)
    col = jnp.arange(S, dtype=jnp.float32)[None, None, :]
    lm = jnp.abs(col - bias[:, :, None]) + 1.0
    too_far = lm > (local_window_size + 1)
    lm = lm / jnp.abs(lm)
    return jnp.where(too_far, -jnp.inf, lm)


def _check(out, ref):
    # Finite mask values are exactly 1.0 (exact in bf16); -inf compares equal.
    same = (out.astype(jnp.float32) == ref) | (jnp.isneginf(out) & jnp.isneginf(ref))
    assert bool(jnp.all(same)), "mask mismatch vs reference"


if __name__ == "__main__":
    # Small but lane-dense shapes (S multiple of 128 keeps stores unmasked).
    B, S, D = 2, 128, 32            # batch, seq, oneHotDimOut
    key = jax.random.PRNGKey(0)
    kx, kp = jax.random.split(key)
    fusion_arr = jax.random.normal(kx, (B, S, D), jnp.float32)
    params = make_params(kp, D)

    ref = _reference(fusion_arr, params, local_window_size=3)

    # 1) auto row tile (generation/dtype-aware picker), bf16 output (default)
    out_auto = comput_att_mask(fusion_arr, params, local_window_size=3)
    out_auto = jax.block_until_ready(out_auto)
    assert out_auto.shape == (B, S, S) and out_auto.dtype == jnp.bfloat16
    _check(out_auto, ref)

    # 2) explicit row_tile=64 exercises the tiled (B, S//tS) grid path
    out_tiled = comput_att_mask(fusion_arr, params, local_window_size=3,
                                row_tile=64)
    out_tiled = jax.block_until_ready(out_tiled)
    assert out_tiled.shape == (B, S, S)
    _check(out_tiled, ref)

    print("KERNEL_OK")
</pallas_src>

<mosaic_0001>
module attributes {stable_mosaic.version = 11 : i64} {
  func.func @_att_mask_kernel(%arg0: i32, %arg1: i32, %arg2: memref<1x128x32xf32, #tpu.memory_space<vmem>>, %arg3: memref<1x32xf32, #tpu.memory_space<vmem>>, %arg4: memref<1x32xf32, #tpu.memory_space<vmem>>, %arg5: memref<32x128xf32, #tpu.memory_space<vmem>>, %arg6: memref<1x128xf32, #tpu.memory_space<vmem>>, %arg7: memref<128x128xf32, #tpu.memory_space<vmem>>, %arg8: memref<1x128xf32, #tpu.memory_space<vmem>>, %arg9: memref<1x128xf32, #tpu.memory_space<vmem>>, %arg10: memref<1x1xf32, #tpu.memory_space<vmem>>, %arg11: memref<1x128x128xbf16, #tpu.memory_space<vmem>>) attributes {dimension_semantics = [#tpu.dimension_semantics<parallel>, #tpu.dimension_semantics<parallel>], iteration_bounds = array<i64: 2, 1>, scalar_prefetch = 0 : i64, scratch_operands = 0 : i64, tpu.core_type = #tpu.core_type<tc>, window_params = [{transform_indices = @transform_0, window_bounds = array<i64: 1, 128, 32>}, {pipeline_mode = #tpu.pipeline_mode<synchronous>, transform_indices = @transform_1, window_bounds = array<i64: 1, 32>}, {pipeline_mode = #tpu.pipeline_mode<synchronous>, transform_indices = @transform_2, window_bounds = array<i64: 1, 32>}, {pipeline_mode = #tpu.pipeline_mode<synchronous>, transform_indices = @transform_3, window_bounds = array<i64: 32, 128>}, {pipeline_mode = #tpu.pipeline_mode<synchronous>, transform_indices = @transform_4, window_bounds = array<i64: 1, 128>}, {pipeline_mode = #tpu.pipeline_mode<synchronous>, transform_indices = @transform_5, window_bounds = array<i64: 128, 128>}, {pipeline_mode = #tpu.pipeline_mode<synchronous>, transform_indices = @transform_6, window_bounds = array<i64: 1, 128>}, {pipeline_mode = #tpu.pipeline_mode<synchronous>, transform_indices = @transform_7, window_bounds = array<i64: 1, 128>}, {pipeline_mode = #tpu.pipeline_mode<synchronous>, transform_indices = @transform_8, window_bounds = array<i64: 1, 1>}, {transform_indices = @transform_9, window_bounds = array<i64: 1, 128, 128>}]} {
    %c0 = arith.constant 0 : index
    %c0_0 = arith.constant 0 : index
    %c0_1 = arith.constant 0 : index
    %0 = vector.load %arg2[%c0, %c0_0, %c0_1] : memref<1x128x32xf32, #tpu.memory_space<vmem>>, vector<1x128x32xf32>
    %1 = vector.shape_cast %0 : vector<1x128x32xf32> to vector<128x32xf32>
    %cst = arith.constant dense<0.000000e+00> : vector<128xf32>
    %2 = vector.multi_reduction <add>, %1, %cst [1] : vector<128x32xf32> to vector<128xf32>
    %3 = vector.shape_cast %2 : vector<128xf32> to vector<128x1xf32>
    %cst_2 = arith.constant 3.200000e+01 : f32
    %4 = vector.broadcast %cst_2 : f32 to vector<128x1xf32>
    %5 = arith.divf %3, %4 : vector<128x1xf32>
    %6 = vector.broadcast %5 : vector<128x1xf32> to vector<128x32xf32>
    %7 = arith.subf %1, %6 : vector<128x32xf32>
    %8 = arith.mulf %7, %7 : vector<128x32xf32>
    %cst_3 = arith.constant dense<0.000000e+00> : vector<128xf32>
    %9 = vector.multi_reduction <add>, %8, %cst_3 [1] : vector<128x32xf32> to vector<128xf32>
    %10 = vector.shape_cast %9 : vector<128xf32> to vector<128x1xf32>
    %cst_4 = arith.constant 3.200000e+01 : f32
    %11 = vector.broadcast %cst_4 : f32 to vector<128x1xf32>
    %12 = arith.divf %10, %11 : vector<128x1xf32>
    %13 = vector.broadcast %5 : vector<128x1xf32> to vector<128x32xf32>
    %14 = arith.subf %1, %13 : vector<128x32xf32>
    %cst_5 = arith.constant 9.99999974E-6 : f32
    %15 = vector.broadcast %cst_5 : f32 to vector<128x1xf32>
    %16 = arith.addf %12, %15 : vector<128x1xf32>
    %17 = math.rsqrt %16 : vector<128x1xf32>
    %18 = vector.broadcast %17 : vector<128x1xf32> to vector<128x32xf32>
    %19 = arith.mulf %14, %18 : vector<128x32xf32>
    %c0_6 = arith.constant 0 : index
    %c0_7 = arith.constant 0 : index
    %20 = vector.load %arg3[%c0_6, %c0_7] : memref<1x32xf32, #tpu.memory_space<vmem>>, vector<1x32xf32>
    %21 = vector.broadcast %20 : vector<1x32xf32> to vector<128x32xf32>
    %22 = arith.mulf %19, %21 : vector<128x32xf32>
    %c0_8 = arith.constant 0 : index
    %c0_9 = arith.constant 0 : index
    %23 = vector.load %arg4[%c0_8, %c0_9] : memref<1x32xf32, #tpu.memory_space<vmem>>, vector<1x32xf32>
    %24 = vector.broadcast %23 : vector<1x32xf32> to vector<128x32xf32>
    %25 = arith.addf %22, %24 : vector<128x32xf32>
    %c0_10 = arith.constant 0 : index
    %c0_11 = arith.constant 0 : index
    %26 = vector.load %arg5[%c0_10, %c0_11] : memref<32x128xf32, #tpu.memory_space<vmem>>, vector<32x128xf32>
    %cst_12 = arith.constant dense<0.000000e+00> : vector<128x128xf32>
    %27 = tpu.matmul %25, %26, %cst_12 {dimension_numbers = #tpu.dot_dimension_numbers<[1], [0], [0], [1], [0, 0, 1, 1], [], []>} : vector<128x32xf32>, vector<32x128xf32>, vector<128x128xf32> -> vector<128x128xf32>
    %c0_13 = arith.constant 0 : index
    %c0_14 = arith.constant 0 : index
    %28 = vector.load %arg6[%c0_13, %c0_14] : memref<1x128xf32, #tpu.memory_space<vmem>>, vector<1x128xf32>
    %29 = vector.broadcast %28 : vector<1x128xf32> to vector<128x128xf32>
    %30 = arith.addf %27, %29 : vector<128x128xf32>
    %cst_15 = arith.constant 0.000000e+00 : f32
    %31 = vector.broadcast %cst_15 : f32 to vector<128x128xf32>
    %32 = arith.maximumf %30, %31 : vector<128x128xf32>
    %c0_16 = arith.constant 0 : index
    %c0_17 = arith.constant 0 : index
    %33 = vector.load %arg7[%c0_16, %c0_17] : memref<128x128xf32, #tpu.memory_space<vmem>>, vector<128x128xf32>
    %cst_18 = arith.constant dense<0.000000e+00> : vector<128x128xf32>
    %34 = tpu.matmul %32, %33, %cst_18 {dimension_numbers = #tpu.dot_dimension_numbers<[1], [0], [0], [1], [0, 0, 1, 1], [], []>} : vector<128x128xf32>, vector<128x128xf32>, vector<128x128xf32> -> vector<128x128xf32>
    %c0_19 = arith.constant 0 : index
    %c0_20 = arith.constant 0 : index
    %35 = vector.load %arg8[%c0_19, %c0_20] : memref<1x128xf32, #tpu.memory_space<vmem>>, vector<1x128xf32>
    %36 = vector.broadcast %35 : vector<1x128xf32> to vector<128x128xf32>
    %37 = arith.addf %34, %36 : vector<128x128xf32>
    %cst_21 = arith.constant 0.000000e+00 : f32
    %38 = vector.broadcast %cst_21 : f32 to vector<128x128xf32>
    %39 = arith.maximumf %37, %38 : vector<128x128xf32>
    %c0_22 = arith.constant 0 : index
    %c0_23 = arith.constant 0 : index
    %40 = vector.load %arg9[%c0_22, %c0_23] : memref<1x128xf32, #tpu.memory_space<vmem>>, vector<1x128xf32>
    %41 = vector.broadcast %40 : vector<1x128xf32> to vector<128x128xf32>
    %42 = arith.mulf %39, %41 : vector<128x128xf32>
    %cst_24 = arith.constant dense<0.000000e+00> : vector<128xf32>
    %43 = vector.multi_reduction <add>, %42, %cst_24 [1] : vector<128x128xf32> to vector<128xf32>
    %44 = vector.shape_cast %43 : vector<128xf32> to vector<128x1xf32>
    %c0_25 = arith.constant 0 : index
    %c0_26 = arith.constant 0 : index
    %45 = vector.load %arg10[%c0_25, %c0_26] : memref<1x1xf32, #tpu.memory_space<vmem>>, vector<1x1xf32>
    %46 = vector.broadcast %45 : vector<1x1xf32> to vector<128x1xf32>
    %47 = arith.addf %44, %46 : vector<128x1xf32>
    %cst_27 = arith.constant 0.000000e+00 : f32
    %48 = vector.broadcast %cst_27 : f32 to vector<128x1xf32>
    %49 = arith.maximumf %47, %48 : vector<128x1xf32>
    %50 = arith.negf %49 : vector<128x1xf32>
    %51 = math.exp %50 : vector<128x1xf32>
    %cst_28 = arith.constant 1.000000e+00 : f32
    %52 = vector.broadcast %cst_28 : f32 to vector<128x1xf32>
    %53 = arith.addf %52, %51 : vector<128x1xf32>
    %54 = arith.divf %52, %53 : vector<128x1xf32>
    %cst_29 = arith.constant 1.280000e+02 : f32
    %55 = vector.broadcast %cst_29 : f32 to vector<128x1xf32>
    %56 = arith.mulf %54, %55 : vector<128x1xf32>
    %57 = math.roundeven %56 : vector<128x1xf32>
    %58 = arith.fptosi %57 : vector<128x1xf32> to vector<128x1xi32>
    %c3_i32 = arith.constant 3 : i32
    %59 = vector.broadcast %c3_i32 : i32 to vector<128x1xi32>
    %60 = arith.subi %58, %59 : vector<128x1xi32>
    %61 = tpu.iota {dimensions = array<i32: 1>} : vector<128x128xi32>
    %62 = vector.broadcast %60 : vector<128x1xi32> to vector<128x128xi32>
    %63 = arith.subi %61, %62 : vector<128x128xi32>
    %64 = tpu.bitcast %63 : vector<128x128xi32> -> vector<128x128xi32>
    %c6_i32 = arith.constant 6 : i32
    %65 = vector.broadcast %c6_i32 : i32 to vector<128x128xi32>
    %66 = arith.cmpi ugt, %64, %65 : vector<128x128xi32>
    %cst_30 = arith.constant 0xFF800000 : f32
    %cst_31 = arith.constant 1.000000e+00 : f32
    %67 = vector.broadcast %cst_30 : f32 to vector<128x128xf32>
    %68 = vector.broadcast %cst_31 : f32 to vector<128x128xf32>
    %69 = arith.select %66, %67, %68 : vector<128x128xi1>, vector<128x128xf32>
    %70 = arith.truncf %69 : vector<128x128xf32> to vector<128x128xbf16>
    %c0_32 = arith.constant 0 : index
    %c0_33 = arith.constant 0 : index
    %c0_34 = arith.constant 0 : index
    %71 = vector.load %arg11[%c0_32, %c0_33, %c0_34] : memref<1x128x128xbf16, #tpu.memory_space<vmem>>, vector<1x128x128xbf16>
    %72 = vector.shape_cast %71 : vector<1x128x128xbf16> to vector<128x128xbf16>
    %73 = vector.shape_cast %70 : vector<128x128xbf16> to vector<1x128x128xbf16>
    tpu.vector_store %arg11[%c0_32, %c0_33, %c0_34], %73 {strides = array<i32>} : memref<1x128x128xbf16, #tpu.memory_space<vmem>>, vector<1x128x128xbf16>,
    return
  }
  func.func @transform_0(%arg0: i32, %arg1: i32) -> (i32, i32, i32) {
    %c0_i32 = arith.constant 0 : i32
    %c0_i32_0 = arith.constant 0 : i32
    return %arg0, %arg1, %c0_i32 : i32, i32, i32
  }
  func.func @transform_1(%arg0: i32, %arg1: i32) -> (i32, i32) {
    %c0_i32 = arith.constant 0 : i32
    %c0_i32_0 = arith.constant 0 : i32
    %c0_i32_1 = arith.constant 0 : i32
    return %c0_i32, %c0_i32_0 : i32, i32
  }
  func.func @transform_2(%arg0: i32, %arg1: i32) -> (i32, i32) {
    %c0_i32 = arith.constant 0 : i32
    %c0_i32_0 = arith.constant 0 : i32
    %c0_i32_1 = arith.constant 0 : i32
    return %c0_i32, %c0_i32_0 : i32, i32
  }
  func.func @transform_3(%arg0: i32, %arg1: i32) -> (i32, i32) {
    %c0_i32 = arith.constant 0 : i32
    %c0_i32_0 = arith.constant 0 : i32
    %c0_i32_1 = arith.constant 0 : i32
    return %c0_i32, %c0_i32_0 : i32, i32
  }
  func.func @transform_4(%arg0: i32, %arg1: i32) -> (i32, i32) {
    %c0_i32 = arith.constant 0 : i32
    %c0_i32_0 = arith.constant 0 : i32
    %c0_i32_1 = arith.constant 0 : i32
    return %c0_i32, %c0_i32_0 : i32, i32
  }
  func.func @transform_5(%arg0: i32, %arg1: i32) -> (i32, i32) {
    %c0_i32 = arith.constant 0 : i32
    %c0_i32_0 = arith.constant 0 : i32
    %c0_i32_1 = arith.constant 0 : i32
    return %c0_i32, %c0_i32_0 : i32, i32
  }
  func.func @transform_6(%arg0: i32, %arg1: i32) -> (i32, i32) {
    %c0_i32 = arith.constant 0 : i32
    %c0_i32_0 = arith.constant 0 : i32
    %c0_i32_1 = arith.constant 0 : i32
    return %c0_i32, %c0_i32_0 : i32, i32
  }
  func.func @transform_7(%arg0: i32, %arg1: i32) -> (i32, i32) {
    %c0_i32 = arith.constant 0 : i32
    %c0_i32_0 = arith.constant 0 : i32
    %c0_i32_1 = arith.constant 0 : i32
    return %c0_i32, %c0_i32_0 : i32, i32
  }
  func.func @transform_8(%arg0: i32, %arg1: i32) -> (i32, i32) {
    %c0_i32 = arith.constant 0 : i32
    %c0_i32_0 = arith.constant 0 : i32
    %c0_i32_1 = arith.constant 0 : i32
    return %c0_i32, %c0_i32_0 : i32, i32
  }
  func.func @transform_9(%arg0: i32, %arg1: i32) -> (i32, i32, i32) {
    %c0_i32 = arith.constant 0 : i32
    %c0_i32_0 = arith.constant 0 : i32
    return %arg0, %arg1, %c0_i32 : i32, i32, i32
  }
}

</mosaic_0001>

<llo_original>
// kernel: tpu_custom_call.1
$region0: #{tpu_custom_call.1}
  #allocation0 [shape = 'u32[]', space=smem, size = 0x4, offset = 0x4, fixed_abs, tag = 'smem constant byte address 0x4 - core index']
  #allocation1 [shape = 'u32[144,128]{1,0:T(1,128)}', space=vmem, size = 0x12000, scoped, tag = 'internal scratch']
  #allocation2 [shape = 'f32[1,1]{1,0:T(1,128)S(1)}', space=vmem, size = 0x200, scoped, tag = 'scoped memory for tpu_custom_call.1']
  %s0 = inlined_call_operand.vmem [shape: f32[2,128,32], index: 0, kind: input, shape index: {}]
  %s1 = inlined_call_operand.vmem [shape: f32[1,32], index: 1, kind: input, shape index: {}]
  %s2 = inlined_call_operand.vmem [shape: f32[1,32], index: 2, kind: input, shape index: {}]
  %s3 = inlined_call_operand.vmem [shape: f32[32,128], index: 3, kind: input, shape index: {}]
  %s4 = inlined_call_operand.vmem [shape: f32[1,128], index: 4, kind: input, shape index: {}]
  %s5 = inlined_call_operand.vmem [shape: f32[128,128], index: 5, kind: input, shape index: {}]
  %s6 = inlined_call_operand.vmem [shape: f32[1,128], index: 6, kind: input, shape index: {}]
  %s7 = inlined_call_operand.vmem [shape: f32[1,128], index: 7, kind: input, shape index: {}]
  %s8 = inlined_call_operand.<no memory space> [shape: f32[1,1], index: 8, kind: input, shape index: {}]
  %s9 = inlined_call_operand.hbm [shape: bf16[2,128,128], index: 9, kind: output, shape index: {}]
  %s10 = sld [smem:[#allocation0]]
  $region69: #{tpu_custom_call.1} parent=0
    _
  %s12 = ssub.s32 1, %s10
  %s13 = scalar_select 0, %s12, %s10
  %v14 = vstv %s8
  %15 = vst [vmem:[#allocation2] sm:$0x1] %v14
  $region1: #{tpu_custom_call.1} parent=0
    #allocation3 [shape = 'u8[65536]{0}', space=vmem, size = 0x10000, scoped, tag = 'output window, operand 0']
    #allocation4 [shape = 's32[2]{0}', space=sflag, size = 0x8, scoped, tag = 'scoped memory for tpu_custom_call.1']
    %16 = vsyncpa [#allocation4], 0
    %s17 = scalar_lea.sflag [#allocation4], 1
    %18 = vsyncpa %s17, 0
    loop: start=0, step=1, limit=4
    $region2: #{tpu_custom_call.1} parent=1 // loop_pre_header
      _
    $region3: #{tpu_custom_call.1} parent=1 // loop_header
      %s20 = sphi 0, %s24
      %p21 = scmp.ge.s32.totalorder %s20, 4
      %s27 = sphi 0, %s39
      %s28 = sphi 0, %s35
      %s29 = sphi 0, %s27
      %s30 = sphi 0, %s28
      %s31 = sphi 0, %s29
      %s32 = sphi 0, %s30
      %s44 = sphi 0, %s46
      %s47 = sphi 0, %s44
      %s48 = sphi 0, %s47
      %s64 = sphi 0, %s48
      %s68 = sphi 0, %s68
      %s70 = sphi 0, %s68
      %s71 = sphi 0, %s70
      %s85 = sphi 0, %s71
      %s89 = sphi 0, %s89
      %s91 = sphi 0, %s89
      %s92 = sphi 0, %s91
      %s106 = sphi 0, %s92
      %s110 = sphi 0, %s110
      %s112 = sphi 0, %s110
      %s113 = sphi 0, %s112
      %s127 = sphi 0, %s113
      %s131 = sphi 0, %s131
      %s133 = sphi 0, %s131
      %s134 = sphi 0, %s133
      %s148 = sphi 0, %s134
      %s152 = sphi 0, %s152
      %s154 = sphi 0, %s152
      %s155 = sphi 0, %s154
      %s169 = sphi 0, %s155
      %s173 = sphi 0, %s173
      %s175 = sphi 0, %s173
      %s176 = sphi 0, %s175
      %s190 = sphi 0, %s176
      %s194 = sphi 0, %s194
      %s196 = sphi 0, %s194
      %s197 = sphi 0, %s196
      %s211 = sphi 0, %s197
      %s215 = sphi 0, %s215
      %s217 = sphi 0, %s215
      %s218 = sphi 0, %s217
      %s232 = sphi 0, %s218
      %s240 = sphi 0, %s242
      %s243 = sphi 0, %s240
      %s244 = sphi 0, %s243
      %s260 = sphi 0, %s244
    $region4: #{tpu_custom_call.1} parent=1 // loop_header_branch
      %23 = sbr.rel (%p21) target = $region8
    $region5: #{tpu_custom_call.1} parent=1 // loop_body
      %s25 = ssub.s32 %s20, 1
      %s26 = ssub.s32 %s20, 2
      %s33 = sadd.s32 1, %s28
      %p34 = scmp.ge.s32.totalorder %s33, 1
      %s35 = scalar_select %p34, 0, %s33
      %s36 = sadd.s32 1, %s27
      %s37 = scalar_select %p34, %s36, %s27
      %p38 = scmp.ge.s32.totalorder %s37, 2
      %s39 = scalar_select %p38, 0, %s37
      %s40 = ssub.s32 %s27, %s39
      %s41 = ssub.s32 %s28, %s35
      %s42 = sor.u32 %s40, %s41
      %p43 = scmp.eq.s32.totalorder %s42, 0
      %s45 = sadd.s32 %s44, 1
      %s46 = scalar_select %p43, %s44, %s45
      %p49 = pneg %p43
      %p50 = scmp.eq.s32.totalorder %s20, 1
      %p51 = por %p49, %p50
      %p52 = scmp.ne.s32.totalorder %s44, %s47
      %p53 = scmp.eq.s32.totalorder %s20, 0
      %p54 = por %p52, %p53
      %p55 = scmp.ne.s32.totalorder %s44, %s47
      %p56 = scmp.eq.s32.totalorder %s25, 1
      %p57 = por %p55, %p56
      %p58 = scmp.ne.s32.totalorder %s47, %s48
      %p59 = scmp.eq.s32.totalorder %s25, 0
      %p60 = por %p58, %p59
      %p61 = scmp.ne.s32.totalorder %s47, %s48
      %p62 = scmp.eq.s32.totalorder %s26, 1
      %p63 = por %p61, %p62
      %p65 = scmp.ne.s32.totalorder %s48, %s64
      %p66 = scmp.eq.s32.totalorder %s26, 0
      %p67 = por %p65, %p66
      %s69 = sadd.s32 %s68, 1
      %p72 = scmp.eq.s32.totalorder %s20, 1
      %p73 = scmp.ne.s32.totalorder %s68, %s70
      %p74 = scmp.eq.s32.totalorder %s20, 0
      %p75 = por %p73, %p74
      %p76 = scmp.ne.s32.totalorder %s68, %s70
      %p77 = scmp.eq.s32.totalorder %s25, 1
      %p78 = por %p76, %p77
      %p79 = scmp.ne.s32.totalorder %s70, %s71
      %p80 = scmp.eq.s32.totalorder %s25, 0
      %p81 = por %p79, %p80
      %p82 = scmp.ne.s32.totalorder %s70, %s71
      %p83 = scmp.eq.s32.totalorder %s26, 1
      %p84 = por %p82, %p83
      %p86 = scmp.ne.s32.totalorder %s71, %s85
      %p87 = scmp.eq.s32.totalorder %s26, 0
      %p88 = por %p86, %p87
      %s90 = sadd.s32 %s89, 1
      %p93 = scmp.eq.s32.totalorder %s20, 1
      %p94 = scmp.ne.s32.totalorder %s89, %s91
      %p95 = scmp.eq.s32.totalorder %s20, 0
      %p96 = por %p94, %p95
      %p97 = scmp.ne.s32.totalorder %s89, %s91
      %p98 = scmp.eq.s32.totalorder %s25, 1
      %p99 = por %p97, %p98
      %p100 = scmp.ne.s32.totalorder %s91, %s92
      %p101 = scmp.eq.s32.totalorder %s25, 0
      %p102 = por %p100, %p101
      %p103 = scmp.ne.s32.totalorder %s91, %s92
      %p104 = scmp.eq.s32.totalorder %s26, 1
      %p105 = por %p103, %p104
      %p107 = scmp.ne.s32.totalorder %s92, %s106
      %p108 = scmp.eq.s32.totalorder %s26, 0
      %p109 = por %p107, %p108
      %s111 = sadd.s32 %s110, 1
      %p114 = scmp.eq.s32.totalorder %s20, 1
      %p115 = scmp.ne.s32.totalorder %s110, %s112
      %p116 = scmp.eq.s32.totalorder %s20, 0
      %p117 = por %p115, %p116
      %p118 = scmp.ne.s32.totalorder %s110, %s112
      %p119 = scmp.eq.s32.totalorder %s25, 1
      %p120 = por %p118, %p119
      %p121 = scmp.ne.s32.totalorder %s112, %s113
      %p122 = scmp.eq.s32.totalorder %s25, 0
      %p123 = por %p121, %p122
      %p124 = scmp.ne.s32.totalorder %s112, %s113
      %p125 = scmp.eq.s32.totalorder %s26, 1
      %p126 = por %p124, %p125
      %p128 = scmp.ne.s32.totalorder %s113, %s127
      %p129 = scmp.eq.s32.totalorder %s26, 0
      %p130 = por %p128, %p129
      %s132 = sadd.s32 %s131, 1
      %p135 = scmp.eq.s32.totalorder %s20, 1
      %p136 = scmp.ne.s32.totalorder %s131, %s133
      %p137 = scmp.eq.s32.totalorder %s20, 0
      %p138 = por %p136, %p137
      %p139 = scmp.ne.s32.totalorder %s131, %s133
      %p140 = scmp.eq.s32.totalorder %s25, 1
      %p141 = por %p139, %p140
      %p142 = scmp.ne.s32.totalorder %s133, %s134
      %p143 = scmp.eq.s32.totalorder %s25, 0
      %p144 = por %p142, %p143
      %p145 = scmp.ne.s32.totalorder %s133, %s134
      %p146 = scmp.eq.s32.totalorder %s26, 1
      %p147 = por %p145, %p146
      %p149 = scmp.ne.s32.totalorder %s134, %s148
      %p150 = scmp.eq.s32.totalorder %s26, 0
      %p151 = por %p149, %p150
      %s153 = sadd.s32 %s152, 1
      %p156 = scmp.eq.s32.totalorder %s20, 1
      %p157 = scmp.ne.s32.totalorder %s152, %s154
      %p158 = scmp.eq.s32.totalorder %s20, 0
      %p159 = por %p157, %p158
      %p160 = scmp.ne.s32.totalorder %s152, %s154
      %p161 = scmp.eq.s32.totalorder %s25, 1
      %p162 = por %p160, %p161
      %p163 = scmp.ne.s32.totalorder %s154, %s155
      %p164 = scmp.eq.s32.totalorder %s25, 0
      %p165 = por %p163, %p164
      %p166 = scmp.ne.s32.totalorder %s154, %s155
      %p167 = scmp.eq.s32.totalorder %s26, 1
      %p168 = por %p166, %p167
      %p170 = scmp.ne.s32.totalorder %s155, %s169
      %p171 = scmp.eq.s32.totalorder %s26, 0
      %p172 = por %p170, %p171
      %s174 = sadd.s32 %s173, 1
      %p177 = scmp.eq.s32.totalorder %s20, 1
      %p178 = scmp.ne.s32.totalorder %s173, %s175
      %p179 = scmp.eq.s32.totalorder %s20, 0
      %p180 = por %p178, %p179
      %p181 = scmp.ne.s32.totalorder %s173, %s175
      %p182 = scmp.eq.s32.totalorder %s25, 1
      %p183 = por %p181, %p182
      %p184 = scmp.ne.s32.totalorder %s175, %s176
      %p185 = scmp.eq.s32.totalorder %s25, 0
      %p186 = por %p184, %p185
      %p187 = scmp.ne.s32.totalorder %s175, %s176
      %p188 = scmp.eq.s32.totalorder %s26, 1
      %p189 = por %p187, %p188
      %p191 = scmp.ne.s32.totalorder %s176, %s190
      %p192 = scmp.eq.s32.totalorder %s26, 0
      %p193 = por %p191, %p192
      %s195 = sadd.s32 %s194, 1
      %p198 = scmp.eq.s32.totalorder %s20, 1
      %p199 = scmp.ne.s32.totalorder %s194, %s196
      %p200 = scmp.eq.s32.totalorder %s20, 0
      %p201 = por %p199, %p200
      %p202 = scmp.ne.s32.totalorder %s194, %s196
      %p203 = scmp.eq.s32.totalorder %s25, 1
      %p204 = por %p202, %p203
      %p205 = scmp.ne.s32.totalorder %s196, %s197
      %p206 = scmp.eq.s32.totalorder %s25, 0
      %p207 = por %p205, %p206
      %p208 = scmp.ne.s32.totalorder %s196, %s197
      %p209 = scmp.eq.s32.totalorder %s26, 1
      %p210 = por %p208, %p209
      %p212 = scmp.ne.s32.totalorder %s197, %s211
      %p213 = scmp.eq.s32.totalorder %s26, 0
      %p214 = por %p212, %p213
      %s216 = sadd.s32 %s215, 1
      %p219 = scmp.eq.s32.totalorder %s20, 1
      %p220 = scmp.ne.s32.totalorder %s215, %s217
      %p221 = scmp.eq.s32.totalorder %s20, 0
      %p222 = por %p220, %p221
      %p223 = scmp.ne.s32.totalorder %s215, %s217
      %p224 = scmp.eq.s32.totalorder %s25, 1
      %p225 = por %p223, %p224
      %p226 = scmp.ne.s32.totalorder %s217, %s218
      %p227 = scmp.eq.s32.totalorder %s25, 0
      %p228 = por %p226, %p227
      %p229 = scmp.ne.s32.totalorder %s217, %s218
      %p230 = scmp.eq.s32.totalorder %s26, 1
      %p231 = por %p229, %p230
      %p233 = scmp.ne.s32.totalorder %s218, %s232
      %p234 = scmp.eq.s32.totalorder %s26, 0
      %p235 = por %p233, %p234
      %s236 = ssub.s32 %s27, %s39
      %s237 = ssub.s32 %s28, %s35
      %s238 = sor.u32 %s236, %s237
      %p239 = scmp.eq.s32.totalorder %s238, 0
      %s241 = sadd.s32 %s240, 1
      %s242 = scalar_select %p239, %s240, %s241
      %p245 = pneg %p239
      %p246 = scmp.eq.s32.totalorder %s20, 1
      %p247 = por %p245, %p246
      %p248 = scmp.ne.s32.totalorder %s240, %s243
      %p249 = scmp.eq.s32.totalorder %s20, 0
      %p250 = por %p248, %p249
      %p251 = scmp.ne.s32.totalorder %s240, %s243
      %p252 = scmp.eq.s32.totalorder %s25, 1
      %p253 = por %p251, %p252
      %p254 = scmp.ne.s32.totalorder %s243, %s244
      %p255 = scmp.eq.s32.totalorder %s25, 0
      %p256 = por %p254, %p255
      %p257 = scmp.ne.s32.totalorder %s243, %s244
      %p258 = scmp.eq.s32.totalorder %s26, 1
      %p259 = por %p257, %p258
      %p261 = scmp.ne.s32.totalorder %s244, %s260
      %p262 = scmp.eq.s32.totalorder %s26, 0
      %p263 = por %p261, %p262
      %p264 = scmp.le.s32.totalorder 1, %s20
      %p265 = scmp.lt.s32.totalorder %s20, 3
      %p266 = pnand %p264, %p265
      %p267 = pneg %p266
      // Predicated region
      $region9: #{tpu_custom_call.1} parent=5 // pred_check
        _
      $region10: #{tpu_custom_call.1} parent=5 // pred_check_branch
        %269 = sbr.rel (%p266) target = $region12
      $region11: #{tpu_custom_call.1} parent=5 // pred_region
        %s270 = ssub.s32 %s20, 1
        // Predicated region
        $region13: #{tpu_custom_call.1} parent=11 // pred_check
          %p271 = pneg %p81
        $region14: #{tpu_custom_call.1} parent=11 // pred_check_branch
          %273 = sbr.rel (%p271) target = $region16
        $region15: #{tpu_custom_call.1} parent=11 // pred_region
          _
        $region16: #{tpu_custom_call.1} parent=11 // pred_fallthru
          _
        // Predicated region
        $region17: #{tpu_custom_call.1} parent=11 // pred_check
          %p274 = pneg %p102
        $region18: #{tpu_custom_call.1} parent=11 // pred_check_branch
          %276 = sbr.rel (%p274) target = $region20
        $region19: #{tpu_custom_call.1} parent=11 // pred_region
          _
        $region20: #{tpu_custom_call.1} parent=11 // pred_fallthru
          _
        // Predicated region
        $region21: #{tpu_custom_call.1} parent=11 // pred_check
          %p277 = pneg %p123
        $region22: #{tpu_custom_call.1} parent=11 // pred_check_branch
          %279 = sbr.rel (%p277) target = $region24
        $region23: #{tpu_custom_call.1} parent=11 // pred_region
          _
        $region24: #{tpu_custom_call.1} parent=11 // pred_fallthru
          _
        // Predicated region
        $region25: #{tpu_custom_call.1} parent=11 // pred_check
          %p280 = pneg %p144
        $region26: #{tpu_custom_call.1} parent=11 // pred_check_branch
          %282 = sbr.rel (%p280) target = $region28
        $region27: #{tpu_custom_call.1} parent=11 // pred_region
          _
        $region28: #{tpu_custom_call.1} parent=11 // pred_fallthru
          _
        // Predicated region
        $region29: #{tpu_custom_call.1} parent=11 // pred_check
          %p283 = pneg %p165
        $region30: #{tpu_custom_call.1} parent=11 // pred_check_branch
          %285 = sbr.rel (%p283) target = $region32
        $region31: #{tpu_custom_call.1} parent=11 // pred_region
          _
        $region32: #{tpu_custom_call.1} parent=11 // pred_fallthru
          _
        // Predicated region
        $region33: #{tpu_custom_call.1} parent=11 // pred_check
          %p286 = pneg %p186
        $region34: #{tpu_custom_call.1} parent=11 // pred_check_branch
          %288 = sbr.rel (%p286) target = $region36
        $region35: #{tpu_custom_call.1} parent=11 // pred_region
          _
        $region36: #{tpu_custom_call.1} parent=11 // pred_fallthru
          _
        // Predicated region
        $region37: #{tpu_custom_call.1} parent=11 // pred_check
          %p289 = pneg %p207
        $region38: #{tpu_custom_call.1} parent=11 // pred_check_branch
          %291 = sbr.rel (%p289) target = $region40
        $region39: #{tpu_custom_call.1} parent=11 // pred_region
          _
        $region40: #{tpu_custom_call.1} parent=11 // pred_fallthru
          _
        // Predicated region
        $region41: #{tpu_custom_call.1} parent=11 // pred_check
          %p292 = pneg %p228
        $region42: #{tpu_custom_call.1} parent=11 // pred_check_branch
          %294 = sbr.rel (%p292) target = $region44
        $region43: #{tpu_custom_call.1} parent=11 // pred_region
          _
        $region44: #{tpu_custom_call.1} parent=11 // pred_fallthru
          _
      $region12: #{tpu_custom_call.1} parent=5 // pred_fallthru
        _
      %p295 = scmp.lt.s32.totalorder %s20, 2
      // Predicated region
      $region45: #{tpu_custom_call.1} parent=5 // pred_check
        %p296 = pneg %p295
      $region46: #{tpu_custom_call.1} parent=5 // pred_check_branch
        %298 = sbr.rel (%p296) target = $region48
      $region47: #{tpu_custom_call.1} parent=5 // pred_region
        // Predicated region
        $region49: #{tpu_custom_call.1} parent=47 // pred_check
          %p299 = pneg %p54
        $region50: #{tpu_custom_call.1} parent=47 // pred_check_branch
          %301 = sbr.rel (%p299) target = $region52
        $region51: #{tpu_custom_call.1} parent=47 // pred_region
          %s302 = smul.u32 16, %s28
          %p303 = scmp.lt.s32.totalorder %s27, 1
          %s304 = scalar_select %p303, %s27, 1
          %p305 = scmp.lt.s32.totalorder %s302, 15
          %s306 = scalar_select %p305, %s302, 15
          %s307 = smul.addr %s304, 16
          %s308 = sadd.s32 %s306, %s307
          %s309 = smul.addr %s308, 8
          %s310 = scalar_lea.vmem %s0, %s309
          %s311 = smul.u32 16, %s28
        $region52: #{tpu_custom_call.1} parent=47 // pred_fallthru
          _
      $region48: #{tpu_custom_call.1} parent=5 // pred_fallthru
        _
      %p312 = scmp.le.s32.totalorder 1, %s20
      %p313 = scmp.lt.s32.totalorder %s20, 3
      %p314 = pnand %p312, %p313
      %p315 = pneg %p314
      // Predicated region
      $region53: #{tpu_custom_call.1} parent=5 // pred_check
        _
      $region54: #{tpu_custom_call.1} parent=5 // pred_check_branch
        %317 = sbr.rel (%p314) target = $region56
      $region55: #{tpu_custom_call.1} parent=5 // pred_region
        %s318 = ssub.s32 %s20, 1
        %s319 = smul.u32 16, %s30
        %p320 = scmp.lt.s32.totalorder %s29, 1
        %s321 = scalar_select %p320, %s29, 1
        %p322 = scmp.lt.s32.totalorder %s319, 15
        %s323 = scalar_select %p322, %s319, 15
        %s324 = smul.addr %s321, 16
        %s325 = sadd.s32 %s323, %s324
        %s326 = smul.addr %s325, 8
        %s327 = scalar_lea.vmem %s0, %s326
        %p328 = pneg %p60
        %p329 = pneg %p57
        %p330 = pneg %p81
        %p331 = pneg %p78
        %p332 = pneg %p102
        %p333 = pneg %p99
        %p334 = pneg %p123
        %p335 = pneg %p120
        %p336 = pneg %p144
        %p337 = pneg %p141
        %p338 = pneg %p165
        %p339 = pneg %p162
        %p340 = pneg %p186
        %p341 = pneg %p183
        %p342 = pneg %p207
        %p343 = pneg %p204
        %p344 = pneg %p228
        %p345 = pneg %p225
        %p346 = pneg %p256
        %p347 = pneg %p253
        %s348 = sand.u32 %s243, 1
        %s349 = scalar_lea.sflag [#allocation4], %s348
        %s350 = sand.u32 %s243, 1
        %s351 = smul.addr %s350, 64
        %s352 = scalar_lea.vmem [#allocation3], %s351
        %s353 = smul.u32 16, %s30
        %p354 = scmp.lt.s32.totalorder %s29, 1
        %s355 = scalar_select %p354, %s29, 1
        %p356 = scmp.lt.s32.totalorder %s353, 15
        %s357 = scalar_select %p356, %s353, 15
        %s358 = smul.addr %s355, 16
        %s359 = sadd.s32 %s357, %s358
        %s360 = smul.addr %s359, 8
        %s361 = scalar_lea.vmem %s0, %s360
        %s362 = smul.u32 16, %s30
        %s363 = smul.u32 16, %s30
        %v364 = vld [vmem:[%s361] sm:$0xff]
        %v365 = vld [vmem:[%s361 + $0x8] sm:$0xff]
        %v366 = vld [vmem:[%s361 + $0x10] sm:$0xff]
        %v367 = vld [vmem:[%s361 + $0x18] sm:$0xff]
        %v368 = vld [vmem:[%s361 + $0x20] sm:$0xff]
        %v369 = vld [vmem:[%s361 + $0x28] sm:$0xff]
        %v370 = vld [vmem:[%s361 + $0x30] sm:$0xff]
        %v371 = vld [vmem:[%s361 + $0x38] sm:$0xff]
        %v372 = vld [vmem:[%s361 + $0x40] sm:$0xff]
        %v373 = vld [vmem:[%s361 + $0x48] sm:$0xff]
        %v374 = vld [vmem:[%s361 + $0x50] sm:$0xff]
        %v375 = vld [vmem:[%s361 + $0x58] sm:$0xff]
        %v376 = vld [vmem:[%s361 + $0x60] sm:$0xff]
        %v377 = vld [vmem:[%s361 + $0x68] sm:$0xff]
        %v378 = vld [vmem:[%s361 + $0x70] sm:$0xff]
        %v379 = vld [vmem:[%s361 + $0x78] sm:$0xff]
        %vm380 = vcmask 261120
        %v381 = vsel %vm380, %v364, 0.0
        %382 = vadd.xlane.f32.xlu0 %v381
        %v383 = vpop.xlane.xlu0 %382
        %v384 = vsel %vm380, %v365, 0.0
        %385 = vadd.xlane.f32.xlu0 %v384
        %v386 = vpop.xlane.xlu0 %385
        %v387 = vsel %vm380, %v366, 0.0
        %388 = vadd.xlane.f32.xlu0 %v387
        %v389 = vpop.xlane.xlu0 %388
        %v390 = vsel %vm380, %v367, 0.0
        %391 = vadd.xlane.f32.xlu0 %v390
        %v392 = vpop.xlane.xlu0 %391
        %v393 = vsel %vm380, %v368, 0.0
        %394 = vadd.xlane.f32.xlu0 %v393
        %v395 = vpop.xlane.xlu0 %394
        %v396 = vsel %vm380, %v369, 0.0
        %397 = vadd.xlane.f32.xlu0 %v396
        %v398 = vpop.xlane.xlu0 %397
        %v399 = vsel %vm380, %v370, 0.0
        %400 = vadd.xlane.f32.xlu0 %v399
        %v401 = vpop.xlane.xlu0 %400
        %v402 = vsel %vm380, %v371, 0.0
        %403 = vadd.xlane.f32.xlu0 %v402
        %v404 = vpop.xlane.xlu0 %403
        %v405 = vsel %vm380, %v372, 0.0
        %406 = vadd.xlane.f32.xlu0 %v405
        %v407 = vpop.xlane.xlu0 %406
        %v408 = vsel %vm380, %v373, 0.0
        %409 = vadd.xlane.f32.xlu0 %v408
        %v410 = vpop.xlane.xlu0 %409
        %v411 = vsel %vm380, %v374, 0.0
        %412 = vadd.xlane.f32.xlu0 %v411
        %v413 = vpop.xlane.xlu0 %412
        %v414 = vsel %vm380, %v375, 0.0
        %415 = vadd.xlane.f32.xlu0 %v414
        %v416 = vpop.xlane.xlu0 %415
        %v417 = vsel %vm380, %v376, 0.0
        %418 = vadd.xlane.f32.xlu0 %v417
        %v419 = vpop.xlane.xlu0 %418
        %v420 = vsel %vm380, %v377, 0.0
        %421 = vadd.xlane.f32.xlu0 %v420
        %v422 = vpop.xlane.xlu0 %421
        %v423 = vsel %vm380, %v378, 0.0
        %424 = vadd.xlane.f32.xlu0 %v423
        %v425 = vpop.xlane.xlu0 %424
        %v426 = vsel %vm380, %v379, 0.0
        %427 = vadd.xlane.f32.xlu0 %v426
        %v428 = vpop.xlane.xlu0 %427
        %v429 = vrcp.pop 32.0
        %v430 = vmul.f32 %v383, %v429
        %v431 = vmul.f32 %v386, %v429
        %v432 = vmul.f32 %v389, %v429
        %v433 = vmul.f32 %v392, %v429
        %v434 = vmul.f32 %v395, %v429
        %v435 = vmul.f32 %v398, %v429
        %v436 = vmul.f32 %v401, %v429
        %v437 = vmul.f32 %v404, %v429
        %v438 = vmul.f32 %v407, %v429
        %v439 = vmul.f32 %v410, %v429
        %v440 = vmul.f32 %v413, %v429
        %v441 = vmul.f32 %v416, %v429
        %v442 = vmul.f32 %v419, %v429
        %v443 = vmul.f32 %v422, %v429
        %v444 = vmul.f32 %v425, %v429
        %v445 = vmul.f32 %v428, %v429
        %v446 = vsub.f32 %v364, %v430
        %v447 = vsub.f32 %v365, %v431
        %v448 = vsub.f32 %v366, %v432
        %v449 = vsub.f32 %v367, %v433
        %v450 = vsub.f32 %v368, %v434
        %v451 = vsub.f32 %v369, %v435
        %v452 = vsub.f32 %v370, %v436
        %v453 = vsub.f32 %v371, %v437
        %v454 = vsub.f32 %v372, %v438
        %v455 = vsub.f32 %v373, %v439
        %v456 = vsub.f32 %v374, %v440
        %v457 = vsub.f32 %v375, %v441
        %v458 = vsub.f32 %v376, %v442
        %v459 = vsub.f32 %v377, %v443
        %v460 = vsub.f32 %v378, %v444
        %v461 = vsub.f32 %v379, %v445
        %v462 = vmul.f32 %v446, %v446
        %v463 = vmul.f32 %v447, %v447
        %v464 = vmul.f32 %v448, %v448
        %v465 = vmul.f32 %v449, %v449
        %v466 = vmul.f32 %v450, %v450
        %v467 = vmul.f32 %v451, %v451
        %v468 = vmul.f32 %v452, %v452
        %v469 = vmul.f32 %v453, %v453
        %v470 = vmul.f32 %v454, %v454
        %v471 = vmul.f32 %v455, %v455
        %v472 = vmul.f32 %v456, %v456
        %v473 = vmul.f32 %v457, %v457
        %v474 = vmul.f32 %v458, %v458
        %v475 = vmul.f32 %v459, %v459
        %v476 = vmul.f32 %v460, %v460
        %v477 = vmul.f32 %v461, %v461
        %v478 = vsel %vm380, %v462, 0.0
        %479 = vadd.xlane.f32.xlu0 %v478
        %v480 = vpop.xlane.xlu0 %479
        %v481 = vsel %vm380, %v463, 0.0
        %482 = vadd.xlane.f32.xlu0 %v481
        %v483 = vpop.xlane.xlu0 %482
        %v484 = vsel %vm380, %v464, 0.0
        %485 = vadd.xlane.f32.xlu0 %v484
        %v486 = vpop.xlane.xlu0 %485
        %v487 = vsel %vm380, %v465, 0.0
        %488 = vadd.xlane.f32.xlu0 %v487
        %v489 = vpop.xlane.xlu0 %488
        %v490 = vsel %vm380, %v466, 0.0
        %491 = vadd.xlane.f32.xlu0 %v490
        %v492 = vpop.xlane.xlu0 %491
        %v493 = vsel %vm380, %v467, 0.0
        %494 = vadd.xlane.f32.xlu0 %v493
        %v495 = vpop.xlane.xlu0 %494
        %v496 = vsel %vm380, %v468, 0.0
        %497 = vadd.xlane.f32.xlu0 %v496
        %v498 = vpop.xlane.xlu0 %497
        %v499 = vsel %vm380, %v469, 0.0
        %500 = vadd.xlane.f32.xlu0 %v499
        %v501 = vpop.xlane.xlu0 %500
        %v502 = vsel %vm380, %v470, 0.0
        %503 = vadd.xlane.f32.xlu0 %v502
        %v504 = vpop.xlane.xlu0 %503
        %v505 = vsel %vm380, %v471, 0.0
        %506 = vadd.xlane.f32.xlu0 %v505
        %v507 = vpop.xlane.xlu0 %506
        %v508 = vsel %vm380, %v472, 0.0
        %509 = vadd.xlane.f32.xlu0 %v508
        %v510 = vpop.xlane.xlu0 %509
        %v511 = vsel %vm380, %v473, 0.0
        %512 = vadd.xlane.f32.xlu0 %v511
        %v513 = vpop.xlane.xlu0 %512
        %v514 = vsel %vm380, %v474, 0.0
        %515 = vadd.xlane.f32.xlu0 %v514
        %v516 = vpop.xlane.xlu0 %515
        %v517 = vsel %vm380, %v475, 0.0
        %518 = vadd.xlane.f32.xlu0 %v517
        %v519 = vpop.xlane.xlu0 %518
        %v520 = vsel %vm380, %v476, 0.0
        %521 = vadd.xlane.f32.xlu0 %v520
        %v522 = vpop.xlane.xlu0 %521
        %v523 = vsel %vm380, %v477, 0.0
        %524 = vadd.xlane.f32.xlu0 %v523
        %v525 = vpop.xlane.xlu0 %524
        %v526 = vmul.f32 %v480, %v429
        %v527 = vmul.f32 %v483, %v429
        %v528 = vmul.f32 %v486, %v429
        %v529 = vmul.f32 %v489, %v429
        %v530 = vmul.f32 %v492, %v429
        %v531 = vmul.f32 %v495, %v429
        %v532 = vmul.f32 %v498, %v429
        %v533 = vmul.f32 %v501, %v429
        %v534 = vmul.f32 %v504, %v429
        %v535 = vmul.f32 %v507, %v429
        %v536 = vmul.f32 %v510, %v429
        %v537 = vmul.f32 %v513, %v429
        %v538 = vmul.f32 %v516, %v429
        %v539 = vmul.f32 %v519, %v429
        %v540 = vmul.f32 %v522, %v429
        %v541 = vmul.f32 %v525, %v429
        %v542 = vadd.f32 %v526, 1e-05
        %v543 = vadd.f32 %v527, 1e-05
        %v544 = vadd.f32 %v528, 1e-05
        %v545 = vadd.f32 %v529, 1e-05
        %v546 = vadd.f32 %v530, 1e-05
        %v547 = vadd.f32 %v531, 1e-05
        %v548 = vadd.f32 %v532, 1e-05
        %v549 = vadd.f32 %v533, 1e-05
        %v550 = vadd.f32 %v534, 1e-05
        %v551 = vadd.f32 %v535, 1e-05
        %v552 = vadd.f32 %v536, 1e-05
        %v553 = vadd.f32 %v537, 1e-05
        %v554 = vadd.f32 %v538, 1e-05
        %v555 = vadd.f32 %v539, 1e-05
        %v556 = vadd.f32 %v540, 1e-05
        %v557 = vadd.f32 %v541, 1e-05
        %v558 = vrsqrt.pop %v542
        %v559 = vrsqrt.pop %v543
        %v560 = vrsqrt.pop %v544
        %v561 = vrsqrt.pop %v545
        %v562 = vrsqrt.pop %v546
        %v563 = vrsqrt.pop %v547
        %v564 = vrsqrt.pop %v548
        %v565 = vrsqrt.pop %v549
        %v566 = vrsqrt.pop %v550
        %v567 = vrsqrt.pop %v551
        %v568 = vrsqrt.pop %v552
        %v569 = vrsqrt.pop %v553
        %v570 = vrsqrt.pop %v554
        %v571 = vrsqrt.pop %v555
        %v572 = vrsqrt.pop %v556
        %v573 = vrsqrt.pop %v557
        %v574 = vmul.f32 %v446, %v558
        %v575 = vmul.f32 %v447, %v559
        %v576 = vmul.f32 %v448, %v560
        %v577 = vmul.f32 %v449, %v561
        %v578 = vmul.f32 %v450, %v562
        %v579 = vmul.f32 %v451, %v563
        %v580 = vmul.f32 %v452, %v564
        %v581 = vmul.f32 %v453, %v565
        %v582 = vmul.f32 %v454, %v566
        %v583 = vmul.f32 %v455, %v567
        %v584 = vmul.f32 %v456, %v568
        %v585 = vmul.f32 %v457, %v569
        %v586 = vmul.f32 %v458, %v570
        %v587 = vmul.f32 %v459, %v571
        %v588 = vmul.f32 %v460, %v572
        %v589 = vmul.f32 %v461, %v573
        %v590 = vld [vmem:[%s1] sm:$0x1]
        %v592 = vlaneseq
        %v593 = vshrl.u32 %v592, 7
        %v594 = vsub.s32 0, %v593
        %v595 = vrot.slane %v590, %v594
        %v597 = vmul.f32 %v574, %v595
        %v598 = vmul.f32 %v575, %v595
        %v599 = vmul.f32 %v576, %v595
        %v600 = vmul.f32 %v577, %v595
        %v601 = vmul.f32 %v578, %v595
        %v602 = vmul.f32 %v579, %v595
        %v603 = vmul.f32 %v580, %v595
        %v604 = vmul.f32 %v581, %v595
        %v605 = vmul.f32 %v582, %v595
        %v606 = vmul.f32 %v583, %v595
        %v607 = vmul.f32 %v584, %v595
        %v608 = vmul.f32 %v585, %v595
        %v609 = vmul.f32 %v586, %v595
        %v610 = vmul.f32 %v587, %v595
        %v611 = vmul.f32 %v588, %v595
        %v612 = vmul.f32 %v589, %v595
        %v613 = vld [vmem:[%s2] sm:$0x1]
        %v615 = vlaneseq
        %v616 = vshrl.u32 %v615, 7
        %v617 = vsub.s32 0, %v616
        %v618 = vrot.slane %v613, %v617
        %v620 = vadd.f32 %v597, %v618
        %v621 = vadd.f32 %v598, %v618
        %v622 = vadd.f32 %v599, %v618
        %v623 = vadd.f32 %v600, %v618
        %v624 = vadd.f32 %v601, %v618
        %v625 = vadd.f32 %v602, %v618
        %v626 = vadd.f32 %v603, %v618
        %v627 = vadd.f32 %v604, %v618
        %v628 = vadd.f32 %v605, %v618
        %v629 = vadd.f32 %v606, %v618
        %v630 = vadd.f32 %v607, %v618
        %v631 = vadd.f32 %v608, %v618
        %v632 = vadd.f32 %v609, %v618
        %v633 = vadd.f32 %v610, %v618
        %v634 = vadd.f32 %v611, %v618
        %v635 = vadd.f32 %v612, %v618
        %v636 = vld [vmem:[%s3] sm:$0xff]
        %v637 = vld [vmem:[%s3 + $0x8] sm:$0xff]
        %v638 = vld [vmem:[%s3 + $0x10] sm:$0xff]
        %v639 = vld [vmem:[%s3 + $0x18] sm:$0xff]
        %v640 = vld [vmem:[%s4] sm:$0x1]
        %v642 = vlaneseq
        %v643 = vshrl.u32 %v642, 7
        %v644 = vsub.s32 0, %v643
        %v645 = vrot.slane %v640, %v644
        %v648 = vsel %vm380, %v620, 0
        %v651 = vsel %vm380, %v621, 0
        %v654 = vsel %vm380, %v622, 0
        %v657 = vsel %vm380, %v623, 0
        %v660 = vsel %vm380, %v624, 0
        %v663 = vsel %vm380, %v625, 0
        %v666 = vsel %vm380, %v626, 0
        %v669 = vsel %vm380, %v627, 0
        %v672 = vsel %vm380, %v628, 0
        %v675 = vsel %vm380, %v629, 0
        %v678 = vsel %vm380, %v630, 0
        %v681 = vsel %vm380, %v631, 0
        %v684 = vsel %vm380, %v632, 0
        %v687 = vsel %vm380, %v633, 0
        %v690 = vsel %vm380, %v634, 0
        %v693 = vsel %vm380, %v635, 0
        %695 = vmatprep.subr.mxu0 0.0
        %696 = vmatpush1.msra.mxu0 %v636
        %697 = vmatprep.subr.mxu0 0.0
        %698 = vmatpush1.msra.mxu0 %v637
        %699 = vmatprep.subr.mxu0 0.0
        %700 = vmatpush1.msra.mxu0 %v638
        %701 = vmatprep.subr.mxu0 0.0
        %702 = vmatpush1.msra.mxu0 %v639
        %703 = vmatprep.subr.mxu0 0.0
        %704 = vmatpush1.msra.mxu0 0.0
        %705 = vmatprep.subr.mxu0 0.0
        %706 = vmatpush1.msra.mxu0 0.0
        %707 = vmatprep.subr.mxu0 0.0
        %708 = vmatpush1.msra.mxu0 0.0
        %709 = vmatprep.subr.mxu0 0.0
        %710 = vmatpush1.msra.mxu0 0.0
        %711 = vmatprep.subr.mxu0 0.0
        %712 = vmatpush1.msra.mxu0 0.0
        %713 = vmatprep.subr.mxu0 0.0
        %714 = vmatpush1.msra.mxu0 0.0
        %715 = vmatprep.subr.mxu0 0.0
        %716 = vmatpush1.msra.mxu0 0.0
        %717 = vmatprep.subr.mxu0 0.0
        %718 = vmatpush1.msra.mxu0 0.0
        %719 = vmatprep.subr.mxu0 0.0
        %720 = vmatpush1.msra.mxu0 0.0
        %721 = vmatprep.subr.mxu0 0.0
        %722 = vmatpush1.msra.mxu0 0.0
        %723 = vmatprep.subr.mxu0 0.0
        %724 = vmatpush1.msra.mxu0 0.0
        %725 = vmatprep.subr.mxu0 0.0
        %726 = vmatpush1.msra.mxu0 0.0
        %727 = vmatprep.subr.mxu0 0.0
        %728 = vmatpush1.msra.mxu0 0.0
        %729 = vmatprep.subr.mxu0 0.0
        %730 = vmatpush1.msra.mxu0 0.0
        %731 = vmatprep.subr.mxu0 0.0
        %732 = vmatpush1.msra.mxu0 0.0
        %733 = vmatprep.subr.mxu0 0.0
        %734 = vmatpush1.msra.mxu0 0.0
        %735 = vmatprep.subr.mxu0 0.0
        %736 = vmatpush1.msra.mxu0 0.0
        %737 = vmatprep.subr.mxu0 0.0
        %738 = vmatpush1.msra.mxu0 0.0
        %739 = vmatprep.subr.mxu0 0.0
        %740 = vmatpush1.msra.mxu0 0.0
        %741 = vmatprep.subr.mxu0 0.0
        %742 = vmatpush1.msra.mxu0 0.0
        %743 = vmatprep.subr.mxu0 0.0
        %744 = vmatpush1.msra.mxu0 0.0
        %745 = vmatprep.subr.mxu0 0.0
        %746 = vmatpush1.msra.mxu0 0.0
        %747 = vmatprep.subr.mxu0 0.0
        %748 = vmatpush1.msra.mxu0 0.0
        %749 = vmatprep.subr.mxu0 0.0
        %750 = vmatpush1.msra.mxu0 0.0
        %751 = vmatprep.subr.mxu0 0.0
        %752 = vmatpush1.msra.mxu0 0.0
        %753 = vmatprep.subr.mxu0 0.0
        %754 = vmatpush1.msra.mxu0 0.0
        %755 = vmatprep.subr.mxu0 0.0
        %756 = vmatpush1.msra.mxu0 0.0
        %757 = vmatprep.subr.mxu0 0.0
        %758 = vmatpush1.msra.mxu0 0.0
        %759 = vmatprep.mubr.f32.mxu0 0.0
        %760 = vmatmul.mubr.f32.gmra.mrb[0].mxu0 %v648
        %v761 = vpop.f32.mrb[0].mxu0
        %v762 = vadd.f32 %v645, %v761
        %v763 = vpop.f32.mrb[0].mxu0
        %764 = vmatprep.mubr.f32.mxu0 0.0
        %765 = vmatmul.mubr.f32.gmra.mrb[0].mxu0 %v651
        %v766 = vpop.f32.mrb[0].mxu0
        %v767 = vadd.f32 %v645, %v766
        %v768 = vpop.f32.mrb[0].mxu0
        %769 = vmatprep.mubr.f32.mxu0 0.0
        %770 = vmatmul.mubr.f32.gmra.mrb[0].mxu0 %v654
        %v771 = vpop.f32.mrb[0].mxu0
        %v772 = vadd.f32 %v645, %v771
        %v773 = vpop.f32.mrb[0].mxu0
        %774 = vmatprep.mubr.f32.mxu0 0.0
        %775 = vmatmul.mubr.f32.gmra.mrb[0].mxu0 %v657
        %v776 = vpop.f32.mrb[0].mxu0
        %v777 = vadd.f32 %v645, %v776
        %v778 = vpop.f32.mrb[0].mxu0
        %779 = vmatprep.mubr.f32.mxu0 0.0
        %780 = vmatmul.mubr.f32.gmra.mrb[0].mxu0 %v660
        %v781 = vpop.f32.mrb[0].mxu0
        %v782 = vadd.f32 %v645, %v781
        %v783 = vpop.f32.mrb[0].mxu0
        %784 = vmatprep.mubr.f32.mxu0 0.0
        %785 = vmatmul.mubr.f32.gmra.mrb[0].mxu0 %v663
        %v786 = vpop.f32.mrb[0].mxu0
        %v787 = vadd.f32 %v645, %v786
        %v788 = vpop.f32.mrb[0].mxu0
        %789 = vmatprep.mubr.f32.mxu0 0.0
        %790 = vmatmul.mubr.f32.gmra.mrb[0].mxu0 %v666
        %v791 = vpop.f32.mrb[0].mxu0
        %v792 = vadd.f32 %v645, %v791
        %v793 = vpop.f32.mrb[0].mxu0
        %794 = vmatprep.mubr.f32.mxu0 0.0
        %795 = vmatmul.mubr.f32.gmra.mrb[0].mxu0 %v669
        %v796 = vpop.f32.mrb[0].mxu0
        %v797 = vadd.f32 %v645, %v796
        %v798 = vpop.f32.mrb[0].mxu0
        %799 = vmatprep.mubr.f32.mxu0 0.0
        %800 = vmatmul.mubr.f32.gmra.mrb[0].mxu0 %v672
        %v801 = vpop.f32.mrb[0].mxu0
        %v802 = vadd.f32 %v645, %v801
        %v803 = vpop.f32.mrb[0].mxu0
        %804 = vmatprep.mubr.f32.mxu0 0.0
        %805 = vmatmul.mubr.f32.gmra.mrb[0].mxu0 %v675
        %v806 = vpop.f32.mrb[0].mxu0
        %v807 = vadd.f32 %v645, %v806
        %v808 = vpop.f32.mrb[0].mxu0
        %809 = vmatprep.mubr.f32.mxu0 0.0
        %810 = vmatmul.mubr.f32.gmra.mrb[0].mxu0 %v678
        %v811 = vpop.f32.mrb[0].mxu0
        %v812 = vadd.f32 %v645, %v811
        %v813 = vpop.f32.mrb[0].mxu0
        %814 = vmatprep.mubr.f32.mxu0 0.0
        %815 = vmatmul.mubr.f32.gmra.mrb[0].mxu0 %v681
        %v816 = vpop.f32.mrb[0].mxu0
        %v817 = vadd.f32 %v645, %v816
        %v818 = vpop.f32.mrb[0].mxu0
        %819 = vmatprep.mubr.f32.mxu0 0.0
        %820 = vmatmul.mubr.f32.gmra.mrb[0].mxu0 %v684
        %v821 = vpop.f32.mrb[0].mxu0
        %v822 = vadd.f32 %v645, %v821
        %v823 = vpop.f32.mrb[0].mxu0
        %824 = vmatprep.mubr.f32.mxu0 0.0
        %825 = vmatmul.mubr.f32.gmra.mrb[0].mxu0 %v687
        %v826 = vpop.f32.mrb[0].mxu0
        %v827 = vadd.f32 %v645, %v826
        %v828 = vpop.f32.mrb[0].mxu0
        %829 = vmatprep.mubr.f32.mxu0 0.0
        %830 = vmatmul.mubr.f32.gmra.mrb[0].mxu0 %v690
        %v831 = vpop.f32.mrb[0].mxu0
        %v832 = vadd.f32 %v645, %v831
        %v833 = vpop.f32.mrb[0].mxu0
        %834 = vmatprep.mubr.f32.mxu0 0.0
        %835 = vmatmul.mubr.f32.gmra.mrb[0].mxu0 %v693
        %v836 = vpop.f32.mrb[0].mxu0
        %v837 = vadd.f32 %v645, %v836
        %v838 = vpop.f32.mrb[0].mxu0
        %839 = vdwg.mxu0
        %v840 = vmax.f32 %v762, 0.0
        %v841 = vmax.f32 %v767, 0.0
        %v842 = vmax.f32 %v772, 0.0
        %v843 = vmax.f32 %v777, 0.0
        %v844 = vmax.f32 %v782, 0.0
        %v845 = vmax.f32 %v787, 0.0
        %v846 = vmax.f32 %v792, 0.0
        %v847 = vmax.f32 %v797, 0.0
        %v848 = vmax.f32 %v802, 0.0
        %v849 = vmax.f32 %v807, 0.0
        %v850 = vmax.f32 %v812, 0.0
        %v851 = vmax.f32 %v817, 0.0
        %v852 = vmax.f32 %v822, 0.0
        %v853 = vmax.f32 %v827, 0.0
        %v854 = vmax.f32 %v832, 0.0
        %v855 = vmax.f32 %v837, 0.0
        %v856 = vld [vmem:[%s5] sm:$0xff]
        %v857 = vld [vmem:[%s5 + $0x8] sm:$0xff]
        %v858 = vld [vmem:[%s5 + $0x10] sm:$0xff]
        %v859 = vld [vmem:[%s5 + $0x18] sm:$0xff]
        %v860 = vld [vmem:[%s5 + $0x20] sm:$0xff]
        %v861 = vld [vmem:[%s5 + $0x28] sm:$0xff]
        %v862 = vld [vmem:[%s5 + $0x30] sm:$0xff]
        %v863 = vld [vmem:[%s5 + $0x38] sm:$0xff]
        %v864 = vld [vmem:[%s5 + $0x40] sm:$0xff]
        %v865 = vld [vmem:[%s5 + $0x48] sm:$0xff]
        %v866 = vld [vmem:[%s5 + $0x50] sm:$0xff]
        %v867 = vld [vmem:[%s5 + $0x58] sm:$0xff]
        %v868 = vld [vmem:[%s5 + $0x60] sm:$0xff]
        %v869 = vld [vmem:[%s5 + $0x68] sm:$0xff]
        %v870 = vld [vmem:[%s5 + $0x70] sm:$0xff]
        %v871 = vld [vmem:[%s5 + $0x78] sm:$0xff]
        %v872 = vld [vmem:[%s6] sm:$0x1]
        %v874 = vlaneseq
        %v875 = vshrl.u32 %v874, 7
        %v876 = vsub.s32 0, %v875
        %v877 = vrot.slane %v872, %v876
        %879 = vmatprep.subr.mxu0 0.0
        %880 = vmatpush1.msra.mxu0 %v856
        %881 = vmatprep.subr.mxu0 0.0
        %882 = vmatpush1.msra.mxu0 %v857
        %883 = vmatprep.subr.mxu0 0.0
        %884 = vmatpush1.msra.mxu0 %v858
        %885 = vmatprep.subr.mxu0 0.0
        %886 = vmatpush1.msra.mxu0 %v859
        %887 = vmatprep.subr.mxu0 0.0
        %888 = vmatpush1.msra.mxu0 %v860
        %889 = vmatprep.subr.mxu0 0.0
        %890 = vmatpush1.msra.mxu0 %v861
        %891 = vmatprep.subr.mxu0 0.0
        %892 = vmatpush1.msra.mxu0 %v862
        %893 = vmatprep.subr.mxu0 0.0
        %894 = vmatpush1.msra.mxu0 %v863
        %895 = vmatprep.subr.mxu0 0.0
        %896 = vmatpush1.msra.mxu0 %v864
        %897 = vmatprep.subr.mxu0 0.0
        %898 = vmatpush1.msra.mxu0 %v865
        %899 = vmatprep.subr.mxu0 0.0
        %900 = vmatpush1.msra.mxu0 %v866
        %901 = vmatprep.subr.mxu0 0.0
        %902 = vmatpush1.msra.mxu0 %v867
        %903 = vmatprep.subr.mxu0 0.0
        %904 = vmatpush1.msra.mxu0 %v868
        %905 = vmatprep.subr.mxu0 0.0
        %906 = vmatpush1.msra.mxu0 %v869
        %907 = vmatprep.subr.mxu0 0.0
        %908 = vmatpush1.msra.mxu0 %v870
        %909 = vmatprep.subr.mxu0 0.0
        %910 = vmatpush1.msra.mxu0 %v871
        %911 = vmatprep.subr.mxu0 0.0
        %912 = vmatpush1.msra.mxu0 0.0
        %913 = vmatprep.subr.mxu0 0.0
        %914 = vmatpush1.msra.mxu0 0.0
        %915 = vmatprep.subr.mxu0 0.0
        %916 = vmatpush1.msra.mxu0 0.0
        %917 = vmatprep.subr.mxu0 0.0
        %918 = vmatpush1.msra.mxu0 0.0
        %919 = vmatprep.subr.mxu0 0.0
        %920 = vmatpush1.msra.mxu0 0.0
        %921 = vmatprep.subr.mxu0 0.0
        %922 = vmatpush1.msra.mxu0 0.0
        %923 = vmatprep.subr.mxu0 0.0
        %924 = vmatpush1.msra.mxu0 0.0
        %925 = vmatprep.subr.mxu0 0.0
        %926 = vmatpush1.msra.mxu0 0.0
        %927 = vmatprep.subr.mxu0 0.0
        %928 = vmatpush1.msra.mxu0 0.0
        %929 = vmatprep.subr.mxu0 0.0
        %930 = vmatpush1.msra.mxu0 0.0
        %931 = vmatprep.subr.mxu0 0.0
        %932 = vmatpush1.msra.mxu0 0.0
        %933 = vmatprep.subr.mxu0 0.0
        %934 = vmatpush1.msra.mxu0 0.0
        %935 = vmatprep.subr.mxu0 0.0
        %936 = vmatpush1.msra.mxu0 0.0
        %937 = vmatprep.subr.mxu0 0.0
        %938 = vmatpush1.msra.mxu0 0.0
        %939 = vmatprep.subr.mxu0 0.0
        %940 = vmatpush1.msra.mxu0 0.0
        %941 = vmatprep.subr.mxu0 0.0
        %942 = vmatpush1.msra.mxu0 0.0
        %943 = vmatprep.mubr.f32.mxu0 0.0
        %944 = vmatmul.mubr.f32.gmra.mrb[0].mxu0 %v840
        %v945 = vpop.f32.mrb[0].mxu0
        %v946 = vadd.f32 %v877, %v945
        %v947 = vpop.f32.mrb[0].mxu0
        %948 = vmatprep.mubr.f32.mxu0 0.0
        %949 = vmatmul.mubr.f32.gmra.mrb[0].mxu0 %v841
        %v950 = vpop.f32.mrb[0].mxu0
        %v951 = vadd.f32 %v877, %v950
        %v952 = vpop.f32.mrb[0].mxu0
        %953 = vmatprep.mubr.f32.mxu0 0.0
        %954 = vmatmul.mubr.f32.gmra.mrb[0].mxu0 %v842
        %v955 = vpop.f32.mrb[0].mxu0
        %v956 = vadd.f32 %v877, %v955
        %v957 = vpop.f32.mrb[0].mxu0
        %958 = vmatprep.mubr.f32.mxu0 0.0
        %959 = vmatmul.mubr.f32.gmra.mrb[0].mxu0 %v843
        %v960 = vpop.f32.mrb[0].mxu0
        %v961 = vadd.f32 %v877, %v960
        %v962 = vpop.f32.mrb[0].mxu0
        %963 = vmatprep.mubr.f32.mxu0 0.0
        %964 = vmatmul.mubr.f32.gmra.mrb[0].mxu0 %v844
        %v965 = vpop.f32.mrb[0].mxu0
        %v966 = vadd.f32 %v877, %v965
        %v967 = vpop.f32.mrb[0].mxu0
        %968 = vmatprep.mubr.f32.mxu0 0.0
        %969 = vmatmul.mubr.f32.gmra.mrb[0].mxu0 %v845
        %v970 = vpop.f32.mrb[0].mxu0
        %v971 = vadd.f32 %v877, %v970
        %v972 = vpop.f32.mrb[0].mxu0
        %973 = vmatprep.mubr.f32.mxu0 0.0
        %974 = vmatmul.mubr.f32.gmra.mrb[0].mxu0 %v846
        %v975 = vpop.f32.mrb[0].mxu0
        %v976 = vadd.f32 %v877, %v975
        %v977 = vpop.f32.mrb[0].mxu0
        %978 = vmatprep.mubr.f32.mxu0 0.0
        %979 = vmatmul.mubr.f32.gmra.mrb[0].mxu0 %v847
        %v980 = vpop.f32.mrb[0].mxu0
        %v981 = vadd.f32 %v877, %v980
        %v982 = vpop.f32.mrb[0].mxu0
        %983 = vmatprep.mubr.f32.mxu0 0.0
        %984 = vmatmul.mubr.f32.gmra.mrb[0].mxu0 %v848
        %v985 = vpop.f32.mrb[0].mxu0
        %v986 = vadd.f32 %v877, %v985
        %v987 = vpop.f32.mrb[0].mxu0
        %988 = vmatprep.mubr.f32.mxu0 0.0
        %989 = vmatmul.mubr.f32.gmra.mrb[0].mxu0 %v849
        %v990 = vpop.f32.mrb[0].mxu0
        %v991 = vadd.f32 %v877, %v990
        %v992 = vpop.f32.mrb[0].mxu0
        %993 = vmatprep.mubr.f32.mxu0 0.0
        %994 = vmatmul.mubr.f32.gmra.mrb[0].mxu0 %v850
        %v995 = vpop.f32.mrb[0].mxu0
        %v996 = vadd.f32 %v877, %v995
        %v997 = vpop.f32.mrb[0].mxu0
        %998 = vmatprep.mubr.f32.mxu0 0.0
        %999 = vmatmul.mubr.f32.gmra.mrb[0].mxu0 %v851
        %v1000 = vpop.f32.mrb[0].mxu0
        %v1001 = vadd.f32 %v877, %v1000
        %v1002 = vpop.f32.mrb[0].mxu0
        %1003 = vmatprep.mubr.f32.mxu0 0.0
        %1004 = vmatmul.mubr.f32.gmra.mrb[0].mxu0 %v852
        %v1005 = vpop.f32.mrb[0].mxu0
        %v1006 = vadd.f32 %v877, %v1005
        %v1007 = vpop.f32.mrb[0].mxu0
        %1008 = vmatprep.mubr.f32.mxu0 0.0
        %1009 = vmatmul.mubr.f32.gmra.mrb[0].mxu0 %v853
        %v1010 = vpop.f32.mrb[0].mxu0
        %v1011 = vadd.f32 %v877, %v1010
        %v1012 = vpop.f32.mrb[0].mxu0
        %1013 = vmatprep.mubr.f32.mxu0 0.0
        %1014 = vmatmul.mubr.f32.gmra.mrb[0].mxu0 %v854
        %v1015 = vpop.f32.mrb[0].mxu0
        %v1016 = vadd.f32 %v877, %v1015
        %v1017 = vpop.f32.mrb[0].mxu0
        %1018 = vmatprep.mubr.f32.mxu0 0.0
        %1019 = vmatmul.mubr.f32.gmra.mrb[0].mxu0 %v855
        %v1020 = vpop.f32.mrb[0].mxu0
        %v1021 = vadd.f32 %v877, %v1020
        %v1022 = vpop.f32.mrb[0].mxu0
        %1023 = vdwg.mxu0
        %v1024 = vmax.f32 %v946, 0.0
        %v1025 = vmax.f32 %v951, 0.0
        %v1026 = vmax.f32 %v956, 0.0
        %v1027 = vmax.f32 %v961, 0.0
        %v1028 = vmax.f32 %v966, 0.0
        %v1029 = vmax.f32 %v971, 0.0
        %v1030 = vmax.f32 %v976, 0.0
        %v1031 = vmax.f32 %v981, 0.0
        %v1032 = vmax.f32 %v986, 0.0
        %v1033 = vmax.f32 %v991, 0.0
        %v1034 = vmax.f32 %v996, 0.0
        %v1035 = vmax.f32 %v1001, 0.0
        %v1036 = vmax.f32 %v1006, 0.0
        %v1037 = vmax.f32 %v1011, 0.0
        %v1038 = vmax.f32 %v1016, 0.0
        %v1039 = vmax.f32 %v1021, 0.0
        %v1040 = vld [vmem:[%s7] sm:$0x1]
        %v1042 = vlaneseq
        %v1043 = vshrl.u32 %v1042, 7
        %v1044 = vsub.s32 0, %v1043
        %v1045 = vrot.slane %v1040, %v1044
        %v1047 = vmul.f32 %v1024, %v1045
        %v1048 = vmul.f32 %v1025, %v1045
        %v1049 = vmul.f32 %v1026, %v1045
        %v1050 = vmul.f32 %v1027, %v1045
        %v1051 = vmul.f32 %v1028, %v1045
        %v1052 = vmul.f32 %v1029, %v1045
        %v1053 = vmul.f32 %v1030, %v1045
        %v1054 = vmul.f32 %v1031, %v1045
        %v1055 = vmul.f32 %v1032, %v1045
        %v1056 = vmul.f32 %v1033, %v1045
        %v1057 = vmul.f32 %v1034, %v1045
        %v1058 = vmul.f32 %v1035, %v1045
        %v1059 = vmul.f32 %v1036, %v1045
        %v1060 = vmul.f32 %v1037, %v1045
        %v1061 = vmul.f32 %v1038, %v1045
        %v1062 = vmul.f32 %v1039, %v1045
        %1063 = vadd.xlane.f32.xlu0 %v1047
        %v1064 = vpop.xlane.xlu0 %1063
        %1065 = vadd.xlane.f32.xlu0 %v1048
        %v1066 = vpop.xlane.xlu0 %1065
        %1067 = vadd.xlane.f32.xlu0 %v1049
        %v1068 = vpop.xlane.xlu0 %1067
        %1069 = vadd.xlane.f32.xlu0 %v1050
        %v1070 = vpop.xlane.xlu0 %1069
        %1071 = vadd.xlane.f32.xlu0 %v1051
        %v1072 = vpop.xlane.xlu0 %1071
        %1073 = vadd.xlane.f32.xlu0 %v1052
        %v1074 = vpop.xlane.xlu0 %1073
        %1075 = vadd.xlane.f32.xlu0 %v1053
        %v1076 = vpop.xlane.xlu0 %1075
        %1077 = vadd.xlane.f32.xlu0 %v1054
        %v1078 = vpop.xlane.xlu0 %1077
        %1079 = vadd.xlane.f32.xlu0 %v1055
        %v1080 = vpop.xlane.xlu0 %1079
        %1081 = vadd.xlane.f32.xlu0 %v1056
        %v1082 = vpop.xlane.xlu0 %1081
        %1083 = vadd.xlane.f32.xlu0 %v1057
        %v1084 = vpop.xlane.xlu0 %1083
        %1085 = vadd.xlane.f32.xlu0 %v1058
        %v1086 = vpop.xlane.xlu0 %1085
        %1087 = vadd.xlane.f32.xlu0 %v1059
        %v1088 = vpop.xlane.xlu0 %1087
        %1089 = vadd.xlane.f32.xlu0 %v1060
        %v1090 = vpop.xlane.xlu0 %1089
        %1091 = vadd.xlane.f32.xlu0 %v1061
        %v1092 = vpop.xlane.xlu0 %1091
        %1093 = vadd.xlane.f32.xlu0 %v1062
        %v1094 = vpop.xlane.xlu0 %1093
        %v1095 = vld [vmem:[#allocation2] sm:$0x1]
        %v1097 = vlaneseq
        %v1098 = vshrl.u32 %v1097, 7
        %v1099 = vsub.s32 0, %v1098
        %v1100 = vrot.slane %v1095, %v1099
        %v1102 = vadd.f32 %v1064, %v1100
        %v1103 = vadd.f32 %v1066, %v1100
        %v1104 = vadd.f32 %v1068, %v1100
        %v1105 = vadd.f32 %v1070, %v1100
        %v1106 = vadd.f32 %v1072, %v1100
        %v1107 = vadd.f32 %v1074, %v1100
        %v1108 = vadd.f32 %v1076, %v1100
        %v1109 = vadd.f32 %v1078, %v1100
        %v1110 = vadd.f32 %v1080, %v1100
        %v1111 = vadd.f32 %v1082, %v1100
        %v1112 = vadd.f32 %v1084, %v1100
        %v1113 = vadd.f32 %v1086, %v1100
        %v1114 = vadd.f32 %v1088, %v1100
        %v1115 = vadd.f32 %v1090, %v1100
        %v1116 = vadd.f32 %v1092, %v1100
        %v1117 = vadd.f32 %v1094, %v1100
        %v1118 = vmax.f32 %v1102, 0.0
        %v1119 = vmax.f32 %v1103, 0.0
        %v1120 = vmax.f32 %v1104, 0.0
        %v1121 = vmax.f32 %v1105, 0.0
        %v1122 = vmax.f32 %v1106, 0.0
        %v1123 = vmax.f32 %v1107, 0.0
        %v1124 = vmax.f32 %v1108, 0.0
        %v1125 = vmax.f32 %v1109, 0.0
        %v1126 = vmax.f32 %v1110, 0.0
        %v1127 = vmax.f32 %v1111, 0.0
        %v1128 = vmax.f32 %v1112, 0.0
        %v1129 = vmax.f32 %v1113, 0.0
        %v1130 = vmax.f32 %v1114, 0.0
        %v1131 = vmax.f32 %v1115, 0.0
        %v1132 = vmax.f32 %v1116, 0.0
        %v1133 = vmax.f32 %v1117, 0.0
        %v1134 = vxor.u32 %v1118, 2147483648
        %v1135 = vxor.u32 %v1119, 2147483648
        %v1136 = vxor.u32 %v1120, 2147483648
        %v1137 = vxor.u32 %v1121, 2147483648
        %v1138 = vxor.u32 %v1122, 2147483648
        %v1139 = vxor.u32 %v1123, 2147483648
        %v1140 = vxor.u32 %v1124, 2147483648
        %v1141 = vxor.u32 %v1125, 2147483648
        %v1142 = vxor.u32 %v1126, 2147483648
        %v1143 = vxor.u32 %v1127, 2147483648
        %v1144 = vxor.u32 %v1128, 2147483648
        %v1145 = vxor.u32 %v1129, 2147483648
        %v1146 = vxor.u32 %v1130, 2147483648
        %v1147 = vxor.u32 %v1131, 2147483648
        %v1148 = vxor.u32 %v1132, 2147483648
        %v1149 = vxor.u32 %v1133, 2147483648
        %v1150 = vmul.f32 %v1134, 1.442695
        %v1151 = vpow.pop %v1150
        %v1152 = vmul.f32 %v1135, 1.442695
        %v1153 = vpow.pop %v1152
        %v1154 = vmul.f32 %v1136, 1.442695
        %v1155 = vpow.pop %v1154
        %v1156 = vmul.f32 %v1137, 1.442695
        %v1157 = vpow.pop %v1156
        %v1158 = vmul.f32 %v1138, 1.442695
        %v1159 = vpow.pop %v1158
        %v1160 = vmul.f32 %v1139, 1.442695
        %v1161 = vpow.pop %v1160
        %v1162 = vmul.f32 %v1140, 1.442695
        %v1163 = vpow.pop %v1162
        %v1164 = vmul.f32 %v1141, 1.442695
        %v1165 = vpow.pop %v1164
        %v1166 = vmul.f32 %v1142, 1.442695
        %v1167 = vpow.pop %v1166
        %v1168 = vmul.f32 %v1143, 1.442695
        %v1169 = vpow.pop %v1168
        %v1170 = vmul.f32 %v1144, 1.442695
        %v1171 = vpow.pop %v1170
        %v1172 = vmul.f32 %v1145, 1.442695
        %v1173 = vpow.pop %v1172
        %v1174 = vmul.f32 %v1146, 1.442695
        %v1175 = vpow.pop %v1174
        %v1176 = vmul.f32 %v1147, 1.442695
        %v1177 = vpow.pop %v1176
        %v1178 = vmul.f32 %v1148, 1.442695
        %v1179 = vpow.pop %v1178
        %v1180 = vmul.f32 %v1149, 1.442695
        %v1181 = vpow.pop %v1180
        %v1182 = vadd.f32 %v1151, 1.0
        %v1183 = vadd.f32 %v1153, 1.0
        %v1184 = vadd.f32 %v1155, 1.0
        %v1185 = vadd.f32 %v1157, 1.0
        %v1186 = vadd.f32 %v1159, 1.0
        %v1187 = vadd.f32 %v1161, 1.0
        %v1188 = vadd.f32 %v1163, 1.0
        %v1189 = vadd.f32 %v1165, 1.0
        %v1190 = vadd.f32 %v1167, 1.0
        %v1191 = vadd.f32 %v1169, 1.0
        %v1192 = vadd.f32 %v1171, 1.0
        %v1193 = vadd.f32 %v1173, 1.0
        %v1194 = vadd.f32 %v1175, 1.0
        %v1195 = vadd.f32 %v1177, 1.0
        %v1196 = vadd.f32 %v1179, 1.0
        %v1197 = vadd.f32 %v1181, 1.0
        %v1198 = vrcp.pop %v1182
        %v1199 = vmul.f32 1.0, %v1198
        %v1200 = vrcp.pop %v1183
        %v1201 = vmul.f32 1.0, %v1200
        %v1202 = vrcp.pop %v1184
        %v1203 = vmul.f32 1.0, %v1202
        %v1204 = vrcp.pop %v1185
        %v1205 = vmul.f32 1.0, %v1204
        %v1206 = vrcp.pop %v1186
        %v1207 = vmul.f32 1.0, %v1206
        %v1208 = vrcp.pop %v1187
        %v1209 = vmul.f32 1.0, %v1208
        %v1210 = vrcp.pop %v1188
        %v1211 = vmul.f32 1.0, %v1210
        %v1212 = vrcp.pop %v1189
        %v1213 = vmul.f32 1.0, %v1212
        %v1214 = vrcp.pop %v1190
        %v1215 = vmul.f32 1.0, %v1214
        %v1216 = vrcp.pop %v1191
        %v1217 = vmul.f32 1.0, %v1216
        %v1218 = vrcp.pop %v1192
        %v1219 = vmul.f32 1.0, %v1218
        %v1220 = vrcp.pop %v1193
        %v1221 = vmul.f32 1.0, %v1220
        %v1222 = vrcp.pop %v1194
        %v1223 = vmul.f32 1.0, %v1222
        %v1224 = vrcp.pop %v1195
        %v1225 = vmul.f32 1.0, %v1224
        %v1226 = vrcp.pop %v1196
        %v1227 = vmul.f32 1.0, %v1226
        %v1228 = vrcp.pop %v1197
        %v1229 = vmul.f32 1.0, %v1228
        %v1230 = vmul.f32 %v1199, 128.0
        %v1231 = vmul.f32 %v1201, 128.0
        %v1232 = vmul.f32 %v1203, 128.0
        %v1233 = vmul.f32 %v1205, 128.0
        %v1234 = vmul.f32 %v1207, 128.0
        %v1235 = vmul.f32 %v1209, 128.0
        %v1236 = vmul.f32 %v1211, 128.0
        %v1237 = vmul.f32 %v1213, 128.0
        %v1238 = vmul.f32 %v1215, 128.0
        %v1239 = vmul.f32 %v1217, 128.0
        %v1240 = vmul.f32 %v1219, 128.0
        %v1241 = vmul.f32 %v1221, 128.0
        %v1242 = vmul.f32 %v1223, 128.0
        %v1243 = vmul.f32 %v1225, 128.0
        %v1244 = vmul.f32 %v1227, 128.0
        %v1245 = vmul.f32 %v1229, 128.0
        %v1246 = vcvt.f32.s32.ties.to.even %v1230
        %v1247 = vcvt.f32.s32.ties.to.even %v1231
        %v1248 = vcvt.f32.s32.ties.to.even %v1232
        %v1249 = vcvt.f32.s32.ties.to.even %v1233
        %v1250 = vcvt.f32.s32.ties.to.even %v1234
        %v1251 = vcvt.f32.s32.ties.to.even %v1235
        %v1252 = vcvt.f32.s32.ties.to.even %v1236
        %v1253 = vcvt.f32.s32.ties.to.even %v1237
        %v1254 = vcvt.f32.s32.ties.to.even %v1238
        %v1255 = vcvt.f32.s32.ties.to.even %v1239
        %v1256 = vcvt.f32.s32.ties.to.even %v1240
        %v1257 = vcvt.f32.s32.ties.to.even %v1241
        %v1258 = vcvt.f32.s32.ties.to.even %v1242
        %v1259 = vcvt.f32.s32.ties.to.even %v1243
        %v1260 = vcvt.f32.s32.ties.to.even %v1244
        %v1261 = vcvt.f32.s32.ties.to.even %v1245
        %v1262 = vsub.s32 %v1246, 3
        %v1263 = vsub.s32 %v1247, 3
        %v1264 = vsub.s32 %v1248, 3
        %v1265 = vsub.s32 %v1249, 3
        %v1266 = vsub.s32 %v1250, 3
        %v1267 = vsub.s32 %v1251, 3
        %v1268 = vsub.s32 %v1252, 3
        %v1269 = vsub.s32 %v1253, 3
        %v1270 = vsub.s32 %v1254, 3
        %v1271 = vsub.s32 %v1255, 3
        %v1272 = vsub.s32 %v1256, 3
        %v1273 = vsub.s32 %v1257, 3
        %v1274 = vsub.s32 %v1258, 3
        %v1275 = vsub.s32 %v1259, 3
        %v1276 = vsub.s32 %v1260, 3
        %v1277 = vsub.s32 %v1261, 3
        %v1278 = vlaneseq
        %v1279 = vand.u32 %v1278, 127
        %1280 = vset.pattern.permute.xlu0 0
        %1281 = vperm.xlu0 %1280, %v1262
        %v1282 = vpop.permute.xlu0 %1281
        %1283 = vset.pattern.permute.xlu0 0
        %1284 = vperm.xlu0 %1283, %v1263
        %v1285 = vpop.permute.xlu0 %1284
        %1286 = vset.pattern.permute.xlu0 0
        %1287 = vperm.xlu0 %1286, %v1264
        %v1288 = vpop.permute.xlu0 %1287
        %1289 = vset.pattern.permute.xlu0 0
        %1290 = vperm.xlu0 %1289, %v1265
        %v1291 = vpop.permute.xlu0 %1290
        %1292 = vset.pattern.permute.xlu0 0
        %1293 = vperm.xlu0 %1292, %v1266
        %v1294 = vpop.permute.xlu0 %1293
        %1295 = vset.pattern.permute.xlu0 0
        %1296 = vperm.xlu0 %1295, %v1267
        %v1297 = vpop.permute.xlu0 %1296
        %1298 = vset.pattern.permute.xlu0 0
        %1299 = vperm.xlu0 %1298, %v1268
        %v1300 = vpop.permute.xlu0 %1299
        %1301 = vset.pattern.permute.xlu0 0
        %1302 = vperm.xlu0 %1301, %v1269
        %v1303 = vpop.permute.xlu0 %1302
        %1304 = vset.pattern.permute.xlu0 0
        %1305 = vperm.xlu0 %1304, %v1270
        %v1306 = vpop.permute.xlu0 %1305
        %1307 = vset.pattern.permute.xlu0 0
        %1308 = vperm.xlu0 %1307, %v1271
        %v1309 = vpop.permute.xlu0 %1308
        %1310 = vset.pattern.permute.xlu0 0
        %1311 = vperm.xlu0 %1310, %v1272
        %v1312 = vpop.permute.xlu0 %1311
        %1313 = vset.pattern.permute.xlu0 0
        %1314 = vperm.xlu0 %1313, %v1273
        %v1315 = vpop.permute.xlu0 %1314
        %1316 = vset.pattern.permute.xlu0 0
        %1317 = vperm.xlu0 %1316, %v1274
        %v1318 = vpop.permute.xlu0 %1317
        %1319 = vset.pattern.permute.xlu0 0
        %1320 = vperm.xlu0 %1319, %v1275
        %v1321 = vpop.permute.xlu0 %1320
        %1322 = vset.pattern.permute.xlu0 0
        %1323 = vperm.xlu0 %1322, %v1276
        %v1324 = vpop.permute.xlu0 %1323
        %1325 = vset.pattern.permute.xlu0 0
        %1326 = vperm.xlu0 %1325, %v1277
        %v1327 = vpop.permute.xlu0 %1326
        %v1328 = vsub.s32 %v1279, %v1282
        %v1329 = vsub.s32 %v1279, %v1285
        %v1330 = vsub.s32 %v1279, %v1288
        %v1331 = vsub.s32 %v1279, %v1291
        %v1332 = vsub.s32 %v1279, %v1294
        %v1333 = vsub.s32 %v1279, %v1297
        %v1334 = vsub.s32 %v1279, %v1300
        %v1335 = vsub.s32 %v1279, %v1303
        %v1336 = vsub.s32 %v1279, %v1306
        %v1337 = vsub.s32 %v1279, %v1309
        %v1338 = vsub.s32 %v1279, %v1312
        %v1339 = vsub.s32 %v1279, %v1315
        %v1340 = vsub.s32 %v1279, %v1318
        %v1341 = vsub.s32 %v1279, %v1321
        %v1342 = vsub.s32 %v1279, %v1324
        %v1343 = vsub.s32 %v1279, %v1327
        %vm1344 = vcmp.gt.u32.totalorder %v1328, 6
        %vm1345 = vcmp.gt.u32.totalorder %v1329, 6
        %vm1346 = vcmp.gt.u32.totalorder %v1330, 6
        %vm1347 = vcmp.gt.u32.totalorder %v1331, 6
        %vm1348 = vcmp.gt.u32.totalorder %v1332, 6
        %vm1349 = vcmp.gt.u32.totalorder %v1333, 6
        %vm1350 = vcmp.gt.u32.totalorder %v1334, 6
        %vm1351 = vcmp.gt.u32.totalorder %v1335, 6
        %vm1352 = vcmp.gt.u32.totalorder %v1336, 6
        %vm1353 = vcmp.gt.u32.totalorder %v1337, 6
        %vm1354 = vcmp.gt.u32.totalorder %v1338, 6
        %vm1355 = vcmp.gt.u32.totalorder %v1339, 6
        %vm1356 = vcmp.gt.u32.totalorder %v1340, 6
        %vm1357 = vcmp.gt.u32.totalorder %v1341, 6
        %vm1358 = vcmp.gt.u32.totalorder %v1342, 6
        %vm1359 = vcmp.gt.u32.totalorder %v1343, 6
        %v1360 = vsel %vm1344, -inf, 1.0
        %v1361 = vsel %vm1345, -inf, 1.0
        %v1362 = vsel %vm1346, -inf, 1.0
        %v1363 = vsel %vm1347, -inf, 1.0
        %v1364 = vsel %vm1348, -inf, 1.0
        %v1365 = vsel %vm1349, -inf, 1.0
        %v1366 = vsel %vm1350, -inf, 1.0
        %v1367 = vsel %vm1351, -inf, 1.0
        %v1368 = vsel %vm1352, -inf, 1.0
        %v1369 = vsel %vm1353, -inf, 1.0
        %v1370 = vsel %vm1354, -inf, 1.0
        %v1371 = vsel %vm1355, -inf, 1.0
        %v1372 = vsel %vm1356, -inf, 1.0
        %v1373 = vsel %vm1357, -inf, 1.0
        %v1374 = vsel %vm1358, -inf, 1.0
        %v1375 = vsel %vm1359, -inf, 1.0
        %v1376 = vpack.c.bf16 %v1361, %v1360
        %v1377 = vpack.c.bf16 %v1363, %v1362
        %v1378 = vpack.c.bf16 %v1365, %v1364
        %v1379 = vpack.c.bf16 %v1367, %v1366
        %v1380 = vpack.c.bf16 %v1369, %v1368
        %v1381 = vpack.c.bf16 %v1371, %v1370
        %v1382 = vpack.c.bf16 %v1373, %v1372
        %v1383 = vpack.c.bf16 %v1375, %v1374
        %v1392 = vunpack.c.l.b16 %v1376
        %v1393 = vunpack.c.h.b16 %v1376
        %v1394 = vunpack.c.l.b16 %v1377
        %v1395 = vunpack.c.h.b16 %v1377
        %v1396 = vunpack.c.l.b16 %v1378
        %v1397 = vunpack.c.h.b16 %v1378
        %v1398 = vunpack.c.l.b16 %v1379
        %v1399 = vunpack.c.h.b16 %v1379
        %v1400 = vunpack.c.l.b16 %v1380
        %v1401 = vunpack.c.h.b16 %v1380
        %v1402 = vunpack.c.l.b16 %v1381
        %v1403 = vunpack.c.h.b16 %v1381
        %v1404 = vunpack.c.l.b16 %v1382
        %v1405 = vunpack.c.h.b16 %v1382
        %v1406 = vunpack.c.l.b16 %v1383
        %v1407 = vunpack.c.h.b16 %v1383
        %v1408 = vpack.c.b16 %v1392, %v1392
        %v1409 = vpack.c.b16 %v1393, %v1393
        %v1410 = vpack.c.b16 %v1394, %v1394
        %v1411 = vpack.c.b16 %v1395, %v1395
        %v1412 = vpack.c.b16 %v1396, %v1396
        %v1413 = vpack.c.b16 %v1397, %v1397
        %v1414 = vpack.c.b16 %v1398, %v1398
        %v1415 = vpack.c.b16 %v1399, %v1399
        %v1416 = vpack.c.b16 %v1400, %v1400
        %v1417 = vpack.c.b16 %v1401, %v1401
        %v1418 = vpack.c.b16 %v1402, %v1402
        %v1419 = vpack.c.b16 %v1403, %v1403
        %v1420 = vpack.c.b16 %v1404, %v1404
        %v1421 = vpack.c.b16 %v1405, %v1405
        %v1422 = vpack.c.b16 %v1406, %v1406
        %v1423 = vpack.c.b16 %v1407, %v1407
        %1440 = vst [vmem:[%s352] sm:$0xf] %v1408
        %1441 = vst [vmem:[%s352 + $0x4] sm:$0xf] %v1409
        %1442 = vst [vmem:[%s352 + $0x8] sm:$0xf] %v1410
        %1443 = vst [vmem:[%s352 + $0xc] sm:$0xf] %v1411
        %1444 = vst [vmem:[%s352 + $0x10] sm:$0xf] %v1412
        %1445 = vst [vmem:[%s352 + $0x14] sm:$0xf] %v1413
        %1446 = vst [vmem:[%s352 + $0x18] sm:$0xf] %v1414
        %1447 = vst [vmem:[%s352 + $0x1c] sm:$0xf] %v1415
        %1448 = vst [vmem:[%s352 + $0x20] sm:$0xf] %v1416
        %1449 = vst [vmem:[%s352 + $0x24] sm:$0xf] %v1417
        %1450 = vst [vmem:[%s352 + $0x28] sm:$0xf] %v1418
        %1451 = vst [vmem:[%s352 + $0x2c] sm:$0xf] %v1419
        %1452 = vst [vmem:[%s352 + $0x30] sm:$0xf] %v1420
        %1453 = vst [vmem:[%s352 + $0x34] sm:$0xf] %v1421
        %1454 = vst [vmem:[%s352 + $0x38] sm:$0xf] %v1422
        %1455 = vst [vmem:[%s352 + $0x3c] sm:$0xf] %v1423
        %s1456 = sand.u32 %s243, 1
        %s1457 = scalar_lea.sflag [#allocation4], %s1456
        %s1458 = sand.u32 %s243, 1
        %s1459 = smul.addr %s1458, 64
        %s1460 = scalar_lea.vmem [#allocation3], %s1459
        // Predicated region
        $region57: #{tpu_custom_call.1} parent=55 // pred_check
          %p1461 = pneg %p253
        $region58: #{tpu_custom_call.1} parent=55 // pred_check_branch
          %1463 = sbr.rel (%p1461) target = $region60
        $region59: #{tpu_custom_call.1} parent=55 // pred_region
          %s1464 = smul.u32 16, %s30
          %s1466 = ssub.s32 1024, 1024
          %1467 = vsyncadd %s1457, %s1466
          %s1468 = smul.addr %s29, 16
          %s1469 = sadd.s32 %s1464, %s1468
          %s1470 = smul.addr %s1469, 64
          %s1471 = scalar_lea.hbm %s9, %s1470
          %s1472 = sshll.u32 %s1460, 4
          %s1473 = int_to_ptr.vmem [resolvable:$true] %s1472
          %1478 = dma.vmem_to_hbm [thread:$0]  %s1473, 1024, %s1471, %s1457, 64, 64, 4
        $region60: #{tpu_custom_call.1} parent=55 // pred_fallthru
          _
      $region56: #{tpu_custom_call.1} parent=5 // pred_fallthru
        _
      %p1479 = scmp.le.s32.totalorder 2, %s20
      // Predicated region
      $region61: #{tpu_custom_call.1} parent=5 // pred_check
        %p1480 = pneg %p1479
      $region62: #{tpu_custom_call.1} parent=5 // pred_check_branch
        %1482 = sbr.rel (%p1480) target = $region64
      $region63: #{tpu_custom_call.1} parent=5 // pred_region
        %s1483 = ssub.s32 %s20, 2
        // Predicated region
        $region65: #{tpu_custom_call.1} parent=63 // pred_check
          %p1484 = pneg %p259
        $region66: #{tpu_custom_call.1} parent=63 // pred_check_branch
          %1486 = sbr.rel (%p1484) target = $region68
        $region67: #{tpu_custom_call.1} parent=63 // pred_region
          %s1487 = sand.u32 %s244, 1
          %s1488 = scalar_lea.sflag [#allocation4], %s1487
          %s1489 = sand.u32 %s244, 1
          %s1490 = smul.addr %s1489, 64
          %s1491 = scalar_lea.vmem [#allocation3], %s1490
          %1492 = dma.done %s1488, 1024
        $region68: #{tpu_custom_call.1} parent=63 // pred_fallthru
          _
      $region64: #{tpu_custom_call.1} parent=5 // pred_fallthru
        _
    $region6: #{tpu_custom_call.1} parent=1 // loop_footer
      %s24 = sadd.s32 1, %s20
    $region7: #{tpu_custom_call.1} parent=1 // loop_footer_branch
      %19 = sbr.rel target = $region3
    $region8: #{tpu_custom_call.1} parent=1 // loop_exit
      _
    %1493 = vsyncpa [#allocation4], 1
    %s1494 = scalar_lea.sflag [#allocation4], 1
    %1495 = vsyncpa %s1494, 1

</llo_original>
